<compile_context>
chip_gen: v6e
topology: v6e:2x2x1
jax: 0.10.0
libtpu: 0.0.40
codegen_flags: <defaults>
</compile_context>

<pallas_src>
import functools

import jax
import jax.numpy as jnp
import numpy as np
from jax import lax
from jax.experimental import pallas as pl
from jax.experimental.pallas import tpu as pltpu


def _convlstm_kernel(p_ref, w_ref, b_ref, c_ref, hc_ref):
    # p_ref : (BM, KKCp)   bf16  im2col patches of [x ; h] (zero-padded K dim)
    # w_ref : (KKCp, 4*Hc) bf16  flattened conv weight, gate columns [f|i|o|g]
    # b_ref : (1, 4*Hc)    f32   bias, gate columns [f|i|o|g]
    # c_ref : (BM, 4*Hc)   f32   c_prev in lanes [0,Hc), zeros elsewhere
    # hc_ref: (BM, 4*Hc)   f32   packed output: h in lanes [0,Hc), c in [2Hc,3Hc)
    BM = p_ref.shape[0]
    G = w_ref.shape[1]          # 4 * Hc
    Hc = G // 4

    # One MXU matmul (conv-as-GEMM), k*k*C-deep contraction, f32 accumulation.
    gates = jnp.dot(p_ref[...], w_ref[...],
                    preferred_element_type=jnp.float32) + b_ref[...]

    # Full-width gate activation with a single transcendental (EUP) pass:
    #   lanes [0, 3*Hc) (f, i, o): sigmoid(x) = 0.5 * tanh(0.5*x) + 0.5
    #   lanes [3*Hc, G) (g)      : tanh(x)
    lane = lax.broadcasted_iota(jnp.int32, (BM, G), 1)
    is_sig = lane < 3 * Hc
    t = jnp.tanh(jnp.where(is_sig, 0.5 * gates, gates))
    act = jnp.where(is_sig, 0.5 * t + 0.5, t)        # [sig f | sig i | sig o | tanh g]

    # Lane alignment via XLU rolls only (no offset column slices).  The
    # [f|i|o|g] column order makes this rotate-direction-proof: f already
    # lines up with c_prev (no roll), o uses a roll of exactly G/2, and i/g
    # only ever appear through the commutative product i*g.
    r2 = pltpu.roll(act, 2 * Hc, axis=1)             # sig(o) at lanes [0, Hc)
    ig = act * r2                                    # sig(i)*tanh(g) at lane blocks 1 and 3
    c_next = act * c_ref[...] + pltpu.roll(ig, Hc, axis=1)   # f*c + i*g valid at [0, Hc)
    h_next = r2 * jnp.tanh(c_next)                   # o*tanh(c') valid at [0, Hc)

    # Pack [h | . | c | .] and do one full-width, unmasked store.
    hc_ref[...] = jnp.where(lane < Hc, h_next,
                            pltpu.roll(c_next, 2 * Hc, axis=1))


@functools.partial(jax.jit, static_argnames=("k",))
def conv_lstm_cell(x, h, c, weight, bias, *, k=3):
    """ConvLSTM single step.  x:(N,Cin,H,W), h/c:(N,Hc,H,W), weight:(4Hc,Cin+Hc,k,k),
    bias:(4Hc,).  Returns (h_next, c_next) in NCHW (PyTorch convention)."""
    if k % 2 != 1:
        raise ValueError("SAME padding via k // 2 requires odd k")
    N, Cin, H, W = x.shape
    Hc = h.shape[1]
    C = Cin + Hc
    G = 4 * Hc
    pad = k // 2
    M = N * H * W
    KKC = k * k * C
    KKCp = ((KKC + 127) // 128) * 128                 # pad contraction to a lane multiple

    # ---------------- wrapper-side layout + im2col (XLA) ----------------
    # TODO(synk): at production sizes build the im2col slab in-kernel from a
    # halo'd NHWC block (and keep h/c in the kernel's packed layout across
    # timesteps) so the k*k activation expansion and NCHW<->NHWC transposes
    # stay off the per-step HBM path.
    comb = jnp.transpose(jnp.concatenate([x, h], axis=1), (0, 2, 3, 1))   # (N,H,W,C)
    xp = jnp.pad(comb, ((0, 0), (pad, pad), (pad, pad), (0, 0)))
    taps = [xp[:, dh:dh + H, dw:dw + W, :] for dh in range(k) for dw in range(k)]
    patches = jnp.concatenate(taps, axis=-1).reshape(M, KKC)
    patches = jnp.pad(patches, ((0, 0), (0, KKCp - KKC))).astype(jnp.bfloat16)

    # Flatten the conv weight to (k*k*C, 4*Hc); reorder gate columns from the
    # module's [i|f|o|g] to the kernel's [f|i|o|g] (see kernel comment).
    w4 = jnp.transpose(weight, (2, 3, 1, 0)).reshape(KKC, 4, Hc)
    w_flat = jnp.concatenate([w4[:, 1], w4[:, 0], w4[:, 2], w4[:, 3]], axis=-1)
    w_flat = jnp.pad(w_flat, ((0, KKCp - KKC), (0, 0))).astype(jnp.bfloat16)
    b4 = bias.astype(jnp.float32).reshape(4, Hc)
    b_flat = jnp.concatenate([b4[1], b4[0], b4[2], b4[3]]).reshape(1, G)

    # c_prev placed in lanes [0, Hc) of a lane-dense 4*Hc-wide block.
    c_rows = jnp.transpose(c, (0, 2, 3, 1)).reshape(M, Hc).astype(jnp.float32)
    c_pad = jnp.pad(c_rows, ((0, 0), (0, G - Hc)))

    # ------------- grid: batch folded into the matmul M dimension -------------
    # Two "parallel" row blocks: keeps both v7x TensorCores busy while the
    # per-block GEMM stays large (only 2 pipeline steps on single-TC v5e/v6e).
    NB = 2 if (M % 16 == 0) else 1
    BM = M // NB

    hc_packed = pl.pallas_call(
        _convlstm_kernel,
        out_shape=jax.ShapeDtypeStruct((M, G), jnp.float32),
        grid_spec=pltpu.PrefetchScalarGridSpec(
            num_scalar_prefetch=0,
            grid=(NB,),
            in_specs=[
                pl.BlockSpec((BM, KKCp), lambda i: (i, 0)),
                pl.BlockSpec((KKCp, G), lambda i: (0, 0)),   # grid-invariant weight
                pl.BlockSpec((1, G), lambda i: (0, 0)),      # grid-invariant bias
                pl.BlockSpec((BM, G), lambda i: (i, 0)),
            ],
            out_specs=pl.BlockSpec((BM, G), lambda i: (i, 0)),
        ),
        compiler_params=pltpu.CompilerParams(
            dimension_semantics=("parallel",),
            vmem_limit_bytes=32 * 1024 * 1024,
        ),
    )(patches, w_flat, b_flat, c_pad)

    # Unpack [h | . | c | .] and go back to NCHW.
    hc_packed = hc_packed.reshape(N, H, W, G)
    h_next = jnp.transpose(hc_packed[..., 0 * Hc:1 * Hc], (0, 3, 1, 2))
    c_next = jnp.transpose(hc_packed[..., 2 * Hc:3 * Hc], (0, 3, 1, 2))
    return h_next, c_next


def _reference(x, h, c, weight, bias):
    """Pure-JAX f32 reference mirroring the PyTorch module."""
    combined = jnp.concatenate([x, h], axis=1)
    gates = lax.conv_general_dilated(
        combined, weight, window_strides=(1, 1), padding="SAME",
        dimension_numbers=("NCHW", "OIHW", "NCHW"))
    gates = gates + bias.reshape(1, -1, 1, 1)
    i_g, f_g, o_g, g_g = jnp.split(gates, 4, axis=1)
    i_g, f_g, o_g = jax.nn.sigmoid(i_g), jax.nn.sigmoid(f_g), jax.nn.sigmoid(o_g)
    g_g = jnp.tanh(g_g)
    c_next = f_g * c + i_g * g_g
    h_next = o_g * jnp.tanh(c_next)
    return h_next, c_next


if __name__ == "__main__":
    # Small shapes consistent with the module.
    N, in_ch, hid_ch, H, W, K = 2, 4, 32, 16, 16, 3

    key = jax.random.PRNGKey(0)
    kx, kh_, kc_, kw_, kb_ = jax.random.split(key, 5)

    x = jax.random.normal(kx, (N, in_ch, H, W), jnp.float32)
    h0 = jax.random.normal(kh_, (N, hid_ch, H, W), jnp.float32)
    c0 = jax.random.normal(kc_, (N, hid_ch, H, W), jnp.float32)

    # Deterministic params (shapes from nn.Conv2d(in+hid, 4*hid, 3, padding=1)).
    fan_in = (in_ch + hid_ch) * K * K
    bound = 1.0 / np.sqrt(fan_in)
    weight = jax.random.uniform(kw_, (4 * hid_ch, in_ch + hid_ch, K, K),
                                jnp.float32, -bound, bound)
    bias = jax.random.uniform(kb_, (4 * hid_ch,), jnp.float32, -bound, bound)

    h_next, c_next = conv_lstm_cell(x, h0, c0, weight, bias, k=K)
    jax.block_until_ready((h_next, c_next))

    h_ref, c_ref = _reference(x, h0, c0, weight, bias)
    # bf16 MXU inputs (f32 accumulation) vs an all-f32 reference -> relaxed tol.
    np.testing.assert_allclose(np.asarray(h_next), np.asarray(h_ref),
                               rtol=2e-2, atol=2e-2)
    np.testing.assert_allclose(np.asarray(c_next), np.asarray(c_ref),
                               rtol=2e-2, atol=2e-2)

    print("KERNEL_OK")
</pallas_src>

<mosaic_0001>
module attributes {stable_mosaic.version = 11 : i64} {
  func.func @_convlstm_kernel(%arg0: i32, %arg1: memref<256x384xbf16, #tpu.memory_space<vmem>>, %arg2: memref<384x128xbf16, #tpu.memory_space<vmem>>, %arg3: memref<1x128xf32, #tpu.memory_space<vmem>>, %arg4: memref<256x128xf32, #tpu.memory_space<vmem>>, %arg5: memref<256x128xf32, #tpu.memory_space<vmem>>) attributes {dimension_semantics = [#tpu.dimension_semantics<parallel>], iteration_bounds = array<i64: 2>, scalar_prefetch = 0 : i64, scratch_operands = 0 : i64, tpu.core_type = #tpu.core_type<tc>, window_params = [{transform_indices = @transform_0, window_bounds = array<i64: 256, 384>}, {pipeline_mode = #tpu.pipeline_mode<synchronous>, transform_indices = @transform_1, window_bounds = array<i64: 384, 128>}, {pipeline_mode = #tpu.pipeline_mode<synchronous>, transform_indices = @transform_2, window_bounds = array<i64: 1, 128>}, {transform_indices = @transform_3, window_bounds = array<i64: 256, 128>}, {transform_indices = @transform_4, window_bounds = array<i64: 256, 128>}]} {
    %c0 = arith.constant 0 : index
    %c0_0 = arith.constant 0 : index
    %0 = vector.load %arg1[%c0, %c0_0] : memref<256x384xbf16, #tpu.memory_space<vmem>>, vector<256x384xbf16>
    %c0_1 = arith.constant 0 : index
    %c0_2 = arith.constant 0 : index
    %1 = vector.load %arg2[%c0_1, %c0_2] : memref<384x128xbf16, #tpu.memory_space<vmem>>, vector<384x128xbf16>
    %cst = arith.constant dense<0.000000e+00> : vector<256x128xf32>
    %2 = tpu.matmul %0, %1, %cst {dimension_numbers = #tpu.dot_dimension_numbers<[1], [0], [0], [1], [0, 0, 1, 1], [], []>} : vector<256x384xbf16>, vector<384x128xbf16>, vector<256x128xf32> -> vector<256x128xf32>
    %c0_3 = arith.constant 0 : index
    %c0_4 = arith.constant 0 : index
    %3 = vector.load %arg3[%c0_3, %c0_4] : memref<1x128xf32, #tpu.memory_space<vmem>>, vector<1x128xf32>
    %4 = vector.broadcast %3 : vector<1x128xf32> to vector<256x128xf32>
    %5 = arith.addf %2, %4 : vector<256x128xf32>
    %6 = tpu.iota {dimensions = array<i32: 1>} : vector<256x128xi32>
    %c96_i32 = arith.constant 96 : i32
    %7 = vector.broadcast %c96_i32 : i32 to vector<256x128xi32>
    %8 = arith.cmpi slt, %6, %7 : vector<256x128xi32>
    %cst_5 = arith.constant 5.000000e-01 : f32
    %9 = vector.broadcast %cst_5 : f32 to vector<256x128xf32>
    %10 = arith.mulf %9, %5 : vector<256x128xf32>
    %11 = arith.select %8, %10, %5 : vector<256x128xi1>, vector<256x128xf32>
    %12 = math.tanh %11 : vector<256x128xf32>
    %cst_6 = arith.constant 5.000000e-01 : f32
    %13 = vector.broadcast %cst_6 : f32 to vector<256x128xf32>
    %14 = arith.mulf %13, %12 : vector<256x128xf32>
    %cst_7 = arith.constant 5.000000e-01 : f32
    %15 = vector.broadcast %cst_7 : f32 to vector<256x128xf32>
    %16 = arith.addf %14, %15 : vector<256x128xf32>
    %17 = arith.select %8, %16, %12 : vector<256x128xi1>, vector<256x128xf32>
    %c64_i32 = arith.constant 64 : i32
    %18 = tpu.dynamic_rotate %17 by %c64_i32 dim 1 : vector<256x128xf32>, i32 -> vector<256x128xf32>
    %19 = arith.mulf %17, %18 : vector<256x128xf32>
    %c0_8 = arith.constant 0 : index
    %c0_9 = arith.constant 0 : index
    %20 = vector.load %arg4[%c0_8, %c0_9] : memref<256x128xf32, #tpu.memory_space<vmem>>, vector<256x128xf32>
    %21 = arith.mulf %17, %20 : vector<256x128xf32>
    %c32_i32 = arith.constant 32 : i32
    %22 = tpu.dynamic_rotate %19 by %c32_i32 dim 1 : vector<256x128xf32>, i32 -> vector<256x128xf32>
    %23 = arith.addf %21, %22 : vector<256x128xf32>
    %24 = math.tanh %23 : vector<256x128xf32>
    %25 = arith.mulf %18, %24 : vector<256x128xf32>
    %c32_i32_10 = arith.constant 32 : i32
    %26 = vector.broadcast %c32_i32_10 : i32 to vector<256x128xi32>
    %27 = arith.cmpi slt, %6, %26 : vector<256x128xi32>
    %c64_i32_11 = arith.constant 64 : i32
    %28 = tpu.dynamic_rotate %23 by %c64_i32_11 dim 1 : vector<256x128xf32>, i32 -> vector<256x128xf32>
    %29 = arith.select %27, %25, %28 : vector<256x128xi1>, vector<256x128xf32>
    %c0_12 = arith.constant 0 : index
    %c0_13 = arith.constant 0 : index
    %30 = vector.load %arg5[%c0_12, %c0_13] : memref<256x128xf32, #tpu.memory_space<vmem>>, vector<256x128xf32>
    tpu.vector_store %arg5[%c0_12, %c0_13], %29 {strides = array<i32>} : memref<256x128xf32, #tpu.memory_space<vmem>>, vector<256x128xf32>,
    return
  }
  func.func @transform_0(%arg0: i32) -> (i32, i32) {
    %c0_i32 = arith.constant 0 : i32
    %c0_i32_0 = arith.constant 0 : i32
    return %arg0, %c0_i32 : i32, i32
  }
  func.func @transform_1(%arg0: i32) -> (i32, i32) {
    %c0_i32 = arith.constant 0 : i32
    %c0_i32_0 = arith.constant 0 : i32
    %c0_i32_1 = arith.constant 0 : i32
    return %c0_i32, %c0_i32_0 : i32, i32
  }
  func.func @transform_2(%arg0: i32) -> (i32, i32) {
    %c0_i32 = arith.constant 0 : i32
    %c0_i32_0 = arith.constant 0 : i32
    %c0_i32_1 = arith.constant 0 : i32
    return %c0_i32, %c0_i32_0 : i32, i32
  }
  func.func @transform_3(%arg0: i32) -> (i32, i32) {
    %c0_i32 = arith.constant 0 : i32
    %c0_i32_0 = arith.constant 0 : i32
    return %arg0, %c0_i32 : i32, i32
  }
  func.func @transform_4(%arg0: i32) -> (i32, i32) {
    %c0_i32 = arith.constant 0 : i32
    %c0_i32_0 = arith.constant 0 : i32
    return %arg0, %c0_i32 : i32, i32
  }
}

</mosaic_0001>

<llo_original>
// kernel: conv_lstm_cell.1
$region0: #{conv_lstm_cell.1}
  #allocation0 [shape = 'u32[]', space=smem, size = 0x4, offset = 0x4, fixed_abs, tag = 'smem constant byte address 0x4 - core index']
  #allocation1 [shape = 'u32[144,128]{1,0:T(1,128)}', space=vmem, size = 0x12000, scoped, tag = 'internal scratch']
  %s0 = inlined_call_operand.vmem [shape: bf16[512,384], index: 0, kind: input, shape index: {}]
  %s1 = inlined_call_operand.vmem [shape: bf16[384,128], index: 1, kind: input, shape index: {}]
  %s2 = inlined_call_operand.vmem [shape: f32[1,128], index: 2, kind: input, shape index: {}]
  %s3 = inlined_call_operand.vmem [shape: f32[512,128], index: 3, kind: input, shape index: {}]
  %s4 = inlined_call_operand.vmem [shape: f32[512,128], index: 4, kind: output, shape index: {}]
  %s5 = sld [smem:[#allocation0]]
  $region49: #{conv_lstm_cell.1} parent=0
    _
  %s7 = ssub.s32 1, %s5
  %s8 = scalar_select 0, %s7, %s5
  loop: start=0, step=1, limit=4
  $region2: #{conv_lstm_cell.1} parent=0 // loop_pre_header
    _
  $region3: #{conv_lstm_cell.1} parent=0 // loop_header
    %s10 = sphi 0, %s14
    %p11 = scmp.ge.s32.totalorder %s10, 4
    %s20 = sphi 0, %s22
    %s23 = sphi 0, %s20
    %s24 = sphi 0, %s23
    %s40 = sphi 0, %s24
    %s44 = sphi 0, %s44
    %s46 = sphi 0, %s44
    %s47 = sphi 0, %s46
    %s61 = sphi 0, %s47
    %s65 = sphi 0, %s65
    %s67 = sphi 0, %s65
    %s68 = sphi 0, %s67
    %s82 = sphi 0, %s68
    %s88 = sphi 0, %s90
    %s91 = sphi 0, %s88
    %s92 = sphi 0, %s91
    %s108 = sphi 0, %s92
    %s114 = sphi 0, %s116
    %s117 = sphi 0, %s114
    %s118 = sphi 0, %s117
    %s134 = sphi 0, %s118
  $region4: #{conv_lstm_cell.1} parent=0 // loop_header_branch
    %13 = sbr.rel (%p11) target = $region8
  $region5: #{conv_lstm_cell.1} parent=0 // loop_body
    %s15 = ssub.s32 %s10, 1
    %s16 = ssub.s32 %s10, 2
    %s17 = sadd.s32 %s10, 1
    %s18 = ssub.s32 %s10, %s17
    %p19 = scmp.eq.s32.totalorder %s18, 0
    %s21 = sadd.s32 %s20, 1
    %s22 = scalar_select %p19, %s20, %s21
    %p25 = pneg %p19
    %p26 = scmp.eq.s32.totalorder %s10, 1
    %p27 = por %p25, %p26
    %p28 = scmp.ne.s32.totalorder %s20, %s23
    %p29 = scmp.eq.s32.totalorder %s10, 0
    %p30 = por %p28, %p29
    %p31 = scmp.ne.s32.totalorder %s20, %s23
    %p32 = scmp.eq.s32.totalorder %s15, 1
    %p33 = por %p31, %p32
    %p34 = scmp.ne.s32.totalorder %s23, %s24
    %p35 = scmp.eq.s32.totalorder %s15, 0
    %p36 = por %p34, %p35
    %p37 = scmp.ne.s32.totalorder %s23, %s24
    %p38 = scmp.eq.s32.totalorder %s16, 1
    %p39 = por %p37, %p38
    %p41 = scmp.ne.s32.totalorder %s24, %s40
    %p42 = scmp.eq.s32.totalorder %s16, 0
    %p43 = por %p41, %p42
    %s45 = sadd.s32 %s44, 1
    %p48 = scmp.eq.s32.totalorder %s10, 1
    %p49 = scmp.ne.s32.totalorder %s44, %s46
    %p50 = scmp.eq.s32.totalorder %s10, 0
    %p51 = por %p49, %p50
    %p52 = scmp.ne.s32.totalorder %s44, %s46
    %p53 = scmp.eq.s32.totalorder %s15, 1
    %p54 = por %p52, %p53
    %p55 = scmp.ne.s32.totalorder %s46, %s47
    %p56 = scmp.eq.s32.totalorder %s15, 0
    %p57 = por %p55, %p56
    %p58 = scmp.ne.s32.totalorder %s46, %s47
    %p59 = scmp.eq.s32.totalorder %s16, 1
    %p60 = por %p58, %p59
    %p62 = scmp.ne.s32.totalorder %s47, %s61
    %p63 = scmp.eq.s32.totalorder %s16, 0
    %p64 = por %p62, %p63
    %s66 = sadd.s32 %s65, 1
    %p69 = scmp.eq.s32.totalorder %s10, 1
    %p70 = scmp.ne.s32.totalorder %s65, %s67
    %p71 = scmp.eq.s32.totalorder %s10, 0
    %p72 = por %p70, %p71
    %p73 = scmp.ne.s32.totalorder %s65, %s67
    %p74 = scmp.eq.s32.totalorder %s15, 1
    %p75 = por %p73, %p74
    %p76 = scmp.ne.s32.totalorder %s67, %s68
    %p77 = scmp.eq.s32.totalorder %s15, 0
    %p78 = por %p76, %p77
    %p79 = scmp.ne.s32.totalorder %s67, %s68
    %p80 = scmp.eq.s32.totalorder %s16, 1
    %p81 = por %p79, %p80
    %p83 = scmp.ne.s32.totalorder %s68, %s82
    %p84 = scmp.eq.s32.totalorder %s16, 0
    %p85 = por %p83, %p84
    %s86 = ssub.s32 %s10, %s17
    %p87 = scmp.eq.s32.totalorder %s86, 0
    %s89 = sadd.s32 %s88, 1
    %s90 = scalar_select %p87, %s88, %s89
    %p93 = pneg %p87
    %p94 = scmp.eq.s32.totalorder %s10, 1
    %p95 = por %p93, %p94
    %p96 = scmp.ne.s32.totalorder %s88, %s91
    %p97 = scmp.eq.s32.totalorder %s10, 0
    %p98 = por %p96, %p97
    %p99 = scmp.ne.s32.totalorder %s88, %s91
    %p100 = scmp.eq.s32.totalorder %s15, 1
    %p101 = por %p99, %p100
    %p102 = scmp.ne.s32.totalorder %s91, %s92
    %p103 = scmp.eq.s32.totalorder %s15, 0
    %p104 = por %p102, %p103
    %p105 = scmp.ne.s32.totalorder %s91, %s92
    %p106 = scmp.eq.s32.totalorder %s16, 1
    %p107 = por %p105, %p106
    %p109 = scmp.ne.s32.totalorder %s92, %s108
    %p110 = scmp.eq.s32.totalorder %s16, 0
    %p111 = por %p109, %p110
    %s112 = ssub.s32 %s10, %s17
    %p113 = scmp.eq.s32.totalorder %s112, 0
    %s115 = sadd.s32 %s114, 1
    %s116 = scalar_select %p113, %s114, %s115
    %p119 = pneg %p113
    %p120 = scmp.eq.s32.totalorder %s10, 1
    %p121 = por %p119, %p120
    %p122 = scmp.ne.s32.totalorder %s114, %s117
    %p123 = scmp.eq.s32.totalorder %s10, 0
    %p124 = por %p122, %p123
    %p125 = scmp.ne.s32.totalorder %s114, %s117
    %p126 = scmp.eq.s32.totalorder %s15, 1
    %p127 = por %p125, %p126
    %p128 = scmp.ne.s32.totalorder %s117, %s118
    %p129 = scmp.eq.s32.totalorder %s15, 0
    %p130 = por %p128, %p129
    %p131 = scmp.ne.s32.totalorder %s117, %s118
    %p132 = scmp.eq.s32.totalorder %s16, 1
    %p133 = por %p131, %p132
    %p135 = scmp.ne.s32.totalorder %s118, %s134
    %p136 = scmp.eq.s32.totalorder %s16, 0
    %p137 = por %p135, %p136
    %p138 = scmp.le.s32.totalorder 1, %s10
    %p139 = scmp.lt.s32.totalorder %s10, 3
    %p140 = pnand %p138, %p139
    %p141 = pneg %p140
    // Predicated region
    $region9: #{conv_lstm_cell.1} parent=5 // pred_check
      _
    $region10: #{conv_lstm_cell.1} parent=5 // pred_check_branch
      %143 = sbr.rel (%p140) target = $region12
    $region11: #{conv_lstm_cell.1} parent=5 // pred_region
      %s144 = ssub.s32 %s10, 1
      // Predicated region
      $region13: #{conv_lstm_cell.1} parent=11 // pred_check
        %p145 = pneg %p57
      $region14: #{conv_lstm_cell.1} parent=11 // pred_check_branch
        %147 = sbr.rel (%p145) target = $region16
      $region15: #{conv_lstm_cell.1} parent=11 // pred_region
        _
      $region16: #{conv_lstm_cell.1} parent=11 // pred_fallthru
        _
      // Predicated region
      $region17: #{conv_lstm_cell.1} parent=11 // pred_check
        %p148 = pneg %p78
      $region18: #{conv_lstm_cell.1} parent=11 // pred_check_branch
        %150 = sbr.rel (%p148) target = $region20
      $region19: #{conv_lstm_cell.1} parent=11 // pred_region
        _
      $region20: #{conv_lstm_cell.1} parent=11 // pred_fallthru
        _
    $region12: #{conv_lstm_cell.1} parent=5 // pred_fallthru
      _
    %p151 = scmp.lt.s32.totalorder %s10, 2
    // Predicated region
    $region21: #{conv_lstm_cell.1} parent=5 // pred_check
      %p152 = pneg %p151
    $region22: #{conv_lstm_cell.1} parent=5 // pred_check_branch
      %154 = sbr.rel (%p152) target = $region24
    $region23: #{conv_lstm_cell.1} parent=5 // pred_region
      // Predicated region
      $region25: #{conv_lstm_cell.1} parent=23 // pred_check
        %p155 = pneg %p30
      $region26: #{conv_lstm_cell.1} parent=23 // pred_check_branch
        %157 = sbr.rel (%p155) target = $region28
      $region27: #{conv_lstm_cell.1} parent=23 // pred_region
        %s158 = smul.u32 32, %s10
        %p159 = scmp.lt.s32.totalorder %s158, 63
        %s160 = scalar_select %p159, %s158, 63
        %s161 = smul.addr %s160, 3
        %s162 = smul.addr %s161, 4
        %s163 = scalar_lea.vmem %s0, %s162
        %s164 = smul.u32 32, %s10
      $region28: #{conv_lstm_cell.1} parent=23 // pred_fallthru
        _
      // Predicated region
      $region29: #{conv_lstm_cell.1} parent=23 // pred_check
        %p165 = pneg %p98
      $region30: #{conv_lstm_cell.1} parent=23 // pred_check_branch
        %167 = sbr.rel (%p165) target = $region32
      $region31: #{conv_lstm_cell.1} parent=23 // pred_region
        %s168 = smul.u32 32, %s10
        %p169 = scmp.lt.s32.totalorder %s168, 63
        %s170 = scalar_select %p169, %s168, 63
        %s171 = smul.addr %s170, 8
        %s172 = scalar_lea.vmem %s3, %s171
        %s173 = smul.u32 32, %s10
      $region32: #{conv_lstm_cell.1} parent=23 // pred_fallthru
        _
    $region24: #{conv_lstm_cell.1} parent=5 // pred_fallthru
      _
    %p174 = scmp.le.s32.totalorder 1, %s10
    %p175 = scmp.lt.s32.totalorder %s10, 3
    %p176 = pnand %p174, %p175
    %p177 = pneg %p176
    // Predicated region
    $region33: #{conv_lstm_cell.1} parent=5 // pred_check
      _
    $region34: #{conv_lstm_cell.1} parent=5 // pred_check_branch
      %179 = sbr.rel (%p176) target = $region36
    $region35: #{conv_lstm_cell.1} parent=5 // pred_region
      %s180 = ssub.s32 %s10, 1
      %s181 = smul.u32 32, %s15
      %p182 = scmp.lt.s32.totalorder %s181, 63
      %s183 = scalar_select %p182, %s181, 63
      %s184 = smul.addr %s183, 3
      %s185 = smul.addr %s184, 4
      %s186 = scalar_lea.vmem %s0, %s185
      %p187 = pneg %p36
      %p188 = pneg %p33
      %p189 = pneg %p57
      %p190 = pneg %p54
      %p191 = pneg %p78
      %p192 = pneg %p75
      %s193 = smul.u32 32, %s15
      %p194 = scmp.lt.s32.totalorder %s193, 63
      %s195 = scalar_select %p194, %s193, 63
      %s196 = smul.addr %s195, 8
      %s197 = scalar_lea.vmem %s3, %s196
      %p198 = pneg %p104
      %p199 = pneg %p101
      %p200 = pneg %p130
      %p201 = pneg %p127
      %s202 = smul.u32 32, %s15
      %p203 = scmp.lt.s32.totalorder %s202, 63
      %s204 = scalar_select %p203, %s202, 63
      %s205 = smul.addr %s204, 8
      %s206 = scalar_lea.vmem %s4, %s205
      %s207 = smul.u32 32, %s15
      %p208 = scmp.lt.s32.totalorder %s207, 63
      %s209 = scalar_select %p208, %s207, 63
      %s210 = smul.addr %s209, 3
      %s211 = smul.addr %s210, 4
      %s212 = scalar_lea.vmem %s0, %s211
      %s213 = smul.u32 32, %s15
      %s214 = smul.u32 32, %s15
      %p215 = scmp.lt.s32.totalorder %s214, 63
      %s216 = scalar_select %p215, %s214, 63
      %s217 = smul.addr %s216, 8
      %s218 = scalar_lea.vmem %s3, %s217
      %s219 = smul.u32 32, %s15
      %s220 = smul.u32 32, %s15
      %p221 = scmp.lt.s32.totalorder %s220, 63
      %s222 = scalar_select %p221, %s220, 63
      %s223 = smul.addr %s222, 8
      %s224 = scalar_lea.vmem %s4, %s223
      %s225 = smul.u32 32, %s15
      %v227 = vld [vmem:[%s212] sm:$0xff]
      %v228 = vld [vmem:[%s212 + $0x8] sm:$0xf]
      %v229 = vld [vmem:[%s212 + $0xc] sm:$0xff]
      %v230 = vld [vmem:[%s212 + $0x14] sm:$0xf]
      %v231 = vld [vmem:[%s212 + $0x18] sm:$0xff]
      %v232 = vld [vmem:[%s212 + $0x20] sm:$0xf]
      %v233 = vld [vmem:[%s212 + $0x24] sm:$0xff]
      %v234 = vld [vmem:[%s212 + $0x2c] sm:$0xf]
      %v235 = vld [vmem:[%s212 + $0x30] sm:$0xff]
      %v236 = vld [vmem:[%s212 + $0x38] sm:$0xf]
      %v237 = vld [vmem:[%s212 + $0x3c] sm:$0xff]
      %v238 = vld [vmem:[%s212 + $0x44] sm:$0xf]
      %v239 = vld [vmem:[%s212 + $0x48] sm:$0xff]
      %v240 = vld [vmem:[%s212 + $0x50] sm:$0xf]
      %v241 = vld [vmem:[%s212 + $0x54] sm:$0xff]
      %v242 = vld [vmem:[%s212 + $0x5c] sm:$0xf]
      %v243 = vld [vmem:[%s212 + $0x60] sm:$0xff]
      %v244 = vld [vmem:[%s212 + $0x68] sm:$0xf]
      %v245 = vld [vmem:[%s212 + $0x6c] sm:$0xff]
      %v246 = vld [vmem:[%s212 + $0x74] sm:$0xf]
      %v247 = vld [vmem:[%s212 + $0x78] sm:$0xff]
      %v248 = vld [vmem:[%s212 + $0x80] sm:$0xf]
      %v249 = vld [vmem:[%s212 + $0x84] sm:$0xff]
      %v250 = vld [vmem:[%s212 + $0x8c] sm:$0xf]
      %v251 = vld [vmem:[%s212 + $0x90] sm:$0xff]
      %v252 = vld [vmem:[%s212 + $0x98] sm:$0xf]
      %v253 = vld [vmem:[%s212 + $0x9c] sm:$0xff]
      %v254 = vld [vmem:[%s212 + $0xa4] sm:$0xf]
      %v255 = vld [vmem:[%s212 + $0xa8] sm:$0xff]
      %v256 = vld [vmem:[%s212 + $0xb0] sm:$0xf]
      %v257 = vld [vmem:[%s212 + $0xb4] sm:$0xff]
      %v258 = vld [vmem:[%s212 + $0xbc] sm:$0xf]
      %v259 = vld [vmem:[%s212 + $0xc0] sm:$0xff]
      %v260 = vld [vmem:[%s212 + $0xc8] sm:$0xf]
      %v261 = vld [vmem:[%s212 + $0xcc] sm:$0xff]
      %v262 = vld [vmem:[%s212 + $0xd4] sm:$0xf]
      %v263 = vld [vmem:[%s212 + $0xd8] sm:$0xff]
      %v264 = vld [vmem:[%s212 + $0xe0] sm:$0xf]
      %v265 = vld [vmem:[%s212 + $0xe4] sm:$0xff]
      %v266 = vld [vmem:[%s212 + $0xec] sm:$0xf]
      %v267 = vld [vmem:[%s212 + $0xf0] sm:$0xff]
      %v268 = vld [vmem:[%s212 + $0xf8] sm:$0xf]
      %v269 = vld [vmem:[%s212 + $0xfc] sm:$0xff]
      %v270 = vld [vmem:[%s212 + $0x104] sm:$0xf]
      %v271 = vld [vmem:[%s212 + $0x108] sm:$0xff]
      %v272 = vld [vmem:[%s212 + $0x110] sm:$0xf]
      %v273 = vld [vmem:[%s212 + $0x114] sm:$0xff]
      %v274 = vld [vmem:[%s212 + $0x11c] sm:$0xf]
      %v275 = vld [vmem:[%s212 + $0x120] sm:$0xff]
      %v276 = vld [vmem:[%s212 + $0x128] sm:$0xf]
      %v277 = vld [vmem:[%s212 + $0x12c] sm:$0xff]
      %v278 = vld [vmem:[%s212 + $0x134] sm:$0xf]
      %v279 = vld [vmem:[%s212 + $0x138] sm:$0xff]
      %v280 = vld [vmem:[%s212 + $0x140] sm:$0xf]
      %v281 = vld [vmem:[%s212 + $0x144] sm:$0xff]
      %v282 = vld [vmem:[%s212 + $0x14c] sm:$0xf]
      %v283 = vld [vmem:[%s212 + $0x150] sm:$0xff]
      %v284 = vld [vmem:[%s212 + $0x158] sm:$0xf]
      %v285 = vld [vmem:[%s212 + $0x15c] sm:$0xff]
      %v286 = vld [vmem:[%s212 + $0x164] sm:$0xf]
      %v287 = vld [vmem:[%s212 + $0x168] sm:$0xff]
      %v288 = vld [vmem:[%s212 + $0x170] sm:$0xf]
      %v289 = vld [vmem:[%s212 + $0x174] sm:$0xff]
      %v290 = vld [vmem:[%s212 + $0x17c] sm:$0xf]
      %v291 = vld [vmem:[%s1] sm:$0xf]
      %v292 = vld [vmem:[%s1 + $0x4] sm:$0xf]
      %v293 = vld [vmem:[%s1 + $0x8] sm:$0xf]
      %v294 = vld [vmem:[%s1 + $0xc] sm:$0xf]
      %v295 = vld [vmem:[%s1 + $0x10] sm:$0xf]
      %v296 = vld [vmem:[%s1 + $0x14] sm:$0xf]
      %v297 = vld [vmem:[%s1 + $0x18] sm:$0xf]
      %v298 = vld [vmem:[%s1 + $0x1c] sm:$0xf]
      %v299 = vld [vmem:[%s1 + $0x20] sm:$0xf]
      %v300 = vld [vmem:[%s1 + $0x24] sm:$0xf]
      %v301 = vld [vmem:[%s1 + $0x28] sm:$0xf]
      %v302 = vld [vmem:[%s1 + $0x2c] sm:$0xf]
      %v303 = vld [vmem:[%s1 + $0x30] sm:$0xf]
      %v304 = vld [vmem:[%s1 + $0x34] sm:$0xf]
      %v305 = vld [vmem:[%s1 + $0x38] sm:$0xf]
      %v306 = vld [vmem:[%s1 + $0x3c] sm:$0xf]
      %v307 = vld [vmem:[%s1 + $0x40] sm:$0xf]
      %v308 = vld [vmem:[%s1 + $0x44] sm:$0xf]
      %v309 = vld [vmem:[%s1 + $0x48] sm:$0xf]
      %v310 = vld [vmem:[%s1 + $0x4c] sm:$0xf]
      %v311 = vld [vmem:[%s1 + $0x50] sm:$0xf]
      %v312 = vld [vmem:[%s1 + $0x54] sm:$0xf]
      %v313 = vld [vmem:[%s1 + $0x58] sm:$0xf]
      %v314 = vld [vmem:[%s1 + $0x5c] sm:$0xf]
      %v315 = vld [vmem:[%s1 + $0x60] sm:$0xf]
      %v316 = vld [vmem:[%s1 + $0x64] sm:$0xf]
      %v317 = vld [vmem:[%s1 + $0x68] sm:$0xf]
      %v318 = vld [vmem:[%s1 + $0x6c] sm:$0xf]
      %v319 = vld [vmem:[%s1 + $0x70] sm:$0xf]
      %v320 = vld [vmem:[%s1 + $0x74] sm:$0xf]
      %v321 = vld [vmem:[%s1 + $0x78] sm:$0xf]
      %v322 = vld [vmem:[%s1 + $0x7c] sm:$0xf]
      %v323 = vld [vmem:[%s1 + $0x80] sm:$0xf]
      %v324 = vld [vmem:[%s1 + $0x84] sm:$0xf]
      %v325 = vld [vmem:[%s1 + $0x88] sm:$0xf]
      %v326 = vld [vmem:[%s1 + $0x8c] sm:$0xf]
      %v327 = vld [vmem:[%s1 + $0x90] sm:$0xf]
      %v328 = vld [vmem:[%s1 + $0x94] sm:$0xf]
      %v329 = vld [vmem:[%s1 + $0x98] sm:$0xf]
      %v330 = vld [vmem:[%s1 + $0x9c] sm:$0xf]
      %v331 = vld [vmem:[%s1 + $0xa0] sm:$0xf]
      %v332 = vld [vmem:[%s1 + $0xa4] sm:$0xf]
      %v333 = vld [vmem:[%s1 + $0xa8] sm:$0xf]
      %v334 = vld [vmem:[%s1 + $0xac] sm:$0xf]
      %v335 = vld [vmem:[%s1 + $0xb0] sm:$0xf]
      %v336 = vld [vmem:[%s1 + $0xb4] sm:$0xf]
      %v337 = vld [vmem:[%s1 + $0xb8] sm:$0xf]
      %v338 = vld [vmem:[%s1 + $0xbc] sm:$0xf]
      %v339 = vld [vmem:[%s2] sm:$0x1]
      %v341 = vlaneseq
      %v342 = vshrl.u32 %v341, 7
      %v343 = vsub.s32 0, %v342
      %v344 = vrot.slane %v339, %v343
      %v410 = vunpack.c.l.b16 %v227
      %v411 = vunpack.c.h.b16 %v227
      %v412 = vunpack.c.l.b16 %v228
      %v413 = vunpack.c.l.b16 %v229
      %v414 = vunpack.c.h.b16 %v229
      %v415 = vunpack.c.l.b16 %v230
      %v416 = vunpack.c.l.b16 %v231
      %v417 = vunpack.c.h.b16 %v231
      %v418 = vunpack.c.l.b16 %v232
      %v419 = vunpack.c.l.b16 %v233
      %v420 = vunpack.c.h.b16 %v233
      %v421 = vunpack.c.l.b16 %v234
      %v422 = vunpack.c.l.b16 %v235
      %v423 = vunpack.c.h.b16 %v235
      %v424 = vunpack.c.l.b16 %v236
      %v425 = vunpack.c.l.b16 %v237
      %v426 = vunpack.c.h.b16 %v237
      %v427 = vunpack.c.l.b16 %v238
      %v428 = vunpack.c.l.b16 %v239
      %v429 = vunpack.c.h.b16 %v239
      %v430 = vunpack.c.l.b16 %v240
      %v431 = vunpack.c.l.b16 %v241
      %v432 = vunpack.c.h.b16 %v241
      %v433 = vunpack.c.l.b16 %v242
      %v434 = vunpack.c.l.b16 %v243
      %v435 = vunpack.c.h.b16 %v243
      %v436 = vunpack.c.l.b16 %v244
      %v437 = vunpack.c.l.b16 %v245
      %v438 = vunpack.c.h.b16 %v245
      %v439 = vunpack.c.l.b16 %v246
      %v440 = vunpack.c.l.b16 %v247
      %v441 = vunpack.c.h.b16 %v247
      %v442 = vunpack.c.l.b16 %v248
      %v443 = vunpack.c.l.b16 %v249
      %v444 = vunpack.c.h.b16 %v249
      %v445 = vunpack.c.l.b16 %v250
      %v446 = vunpack.c.l.b16 %v251
      %v447 = vunpack.c.h.b16 %v251
      %v448 = vunpack.c.l.b16 %v252
      %v449 = vunpack.c.l.b16 %v253
      %v450 = vunpack.c.h.b16 %v253
      %v451 = vunpack.c.l.b16 %v254
      %v452 = vunpack.c.l.b16 %v255
      %v453 = vunpack.c.h.b16 %v255
      %v454 = vunpack.c.l.b16 %v256
      %v455 = vunpack.c.l.b16 %v257
      %v456 = vunpack.c.h.b16 %v257
      %v457 = vunpack.c.l.b16 %v258
      %v458 = vunpack.c.l.b16 %v259
      %v459 = vunpack.c.h.b16 %v259
      %v460 = vunpack.c.l.b16 %v260
      %v461 = vunpack.c.l.b16 %v261
      %v462 = vunpack.c.h.b16 %v261
      %v463 = vunpack.c.l.b16 %v262
      %v464 = vunpack.c.l.b16 %v263
      %v465 = vunpack.c.h.b16 %v263
      %v466 = vunpack.c.l.b16 %v264
      %v467 = vunpack.c.l.b16 %v265
      %v468 = vunpack.c.h.b16 %v265
      %v469 = vunpack.c.l.b16 %v266
      %v470 = vunpack.c.l.b16 %v267
      %v471 = vunpack.c.h.b16 %v267
      %v472 = vunpack.c.l.b16 %v268
      %v473 = vunpack.c.l.b16 %v269
      %v474 = vunpack.c.h.b16 %v269
      %v475 = vunpack.c.l.b16 %v270
      %v476 = vunpack.c.l.b16 %v271
      %v477 = vunpack.c.h.b16 %v271
      %v478 = vunpack.c.l.b16 %v272
      %v479 = vunpack.c.l.b16 %v273
      %v480 = vunpack.c.h.b16 %v273
      %v481 = vunpack.c.l.b16 %v274
      %v482 = vunpack.c.l.b16 %v275
      %v483 = vunpack.c.h.b16 %v275
      %v484 = vunpack.c.l.b16 %v276
      %v485 = vunpack.c.l.b16 %v277
      %v486 = vunpack.c.h.b16 %v277
      %v487 = vunpack.c.l.b16 %v278
      %v488 = vunpack.c.l.b16 %v279
      %v489 = vunpack.c.h.b16 %v279
      %v490 = vunpack.c.l.b16 %v280
      %v491 = vunpack.c.l.b16 %v281
      %v492 = vunpack.c.h.b16 %v281
      %v493 = vunpack.c.l.b16 %v282
      %v494 = vunpack.c.l.b16 %v283
      %v495 = vunpack.c.h.b16 %v283
      %v496 = vunpack.c.l.b16 %v284
      %v497 = vunpack.c.l.b16 %v285
      %v498 = vunpack.c.h.b16 %v285
      %v499 = vunpack.c.l.b16 %v286
      %v500 = vunpack.c.l.b16 %v287
      %v501 = vunpack.c.h.b16 %v287
      %v502 = vunpack.c.l.b16 %v288
      %v503 = vunpack.c.l.b16 %v289
      %v504 = vunpack.c.h.b16 %v289
      %v505 = vunpack.c.l.b16 %v290
      %v506 = vpack.c.b16 %v413, %v410
      %v507 = vpack.c.b16 %v414, %v411
      %v508 = vpack.c.b16 %v415, %v412
      %v509 = vpack.c.b16 %v419, %v416
      %v510 = vpack.c.b16 %v420, %v417
      %v511 = vpack.c.b16 %v421, %v418
      %v512 = vpack.c.b16 %v425, %v422
      %v513 = vpack.c.b16 %v426, %v423
      %v514 = vpack.c.b16 %v427, %v424
      %v515 = vpack.c.b16 %v431, %v428
      %v516 = vpack.c.b16 %v432, %v429
      %v517 = vpack.c.b16 %v433, %v430
      %v518 = vpack.c.b16 %v437, %v434
      %v519 = vpack.c.b16 %v438, %v435
      %v520 = vpack.c.b16 %v439, %v436
      %v521 = vpack.c.b16 %v443, %v440
      %v522 = vpack.c.b16 %v444, %v441
      %v523 = vpack.c.b16 %v445, %v442
      %v524 = vpack.c.b16 %v449, %v446
      %v525 = vpack.c.b16 %v450, %v447
      %v526 = vpack.c.b16 %v451, %v448
      %v527 = vpack.c.b16 %v455, %v452
      %v528 = vpack.c.b16 %v456, %v453
      %v529 = vpack.c.b16 %v457, %v454
      %v530 = vpack.c.b16 %v461, %v458
      %v531 = vpack.c.b16 %v462, %v459
      %v532 = vpack.c.b16 %v463, %v460
      %v533 = vpack.c.b16 %v467, %v464
      %v534 = vpack.c.b16 %v468, %v465
      %v535 = vpack.c.b16 %v469, %v466
      %v536 = vpack.c.b16 %v473, %v470
      %v537 = vpack.c.b16 %v474, %v471
      %v538 = vpack.c.b16 %v475, %v472
      %v539 = vpack.c.b16 %v479, %v476
      %v540 = vpack.c.b16 %v480, %v477
      %v541 = vpack.c.b16 %v481, %v478
      %v542 = vpack.c.b16 %v485, %v482
      %v543 = vpack.c.b16 %v486, %v483
      %v544 = vpack.c.b16 %v487, %v484
      %v545 = vpack.c.b16 %v491, %v488
      %v546 = vpack.c.b16 %v492, %v489
      %v547 = vpack.c.b16 %v493, %v490
      %v548 = vpack.c.b16 %v497, %v494
      %v549 = vpack.c.b16 %v498, %v495
      %v550 = vpack.c.b16 %v499, %v496
      %v551 = vpack.c.b16 %v503, %v500
      %v552 = vpack.c.b16 %v504, %v501
      %v553 = vpack.c.b16 %v505, %v502
      %v650 = vunpack.c.l.b16 %v291
      %v651 = vunpack.c.l.b16 %v292
      %v652 = vunpack.c.l.b16 %v293
      %v653 = vunpack.c.l.b16 %v294
      %v654 = vunpack.c.l.b16 %v295
      %v655 = vunpack.c.l.b16 %v296
      %v656 = vunpack.c.l.b16 %v297
      %v657 = vunpack.c.l.b16 %v298
      %v658 = vunpack.c.l.b16 %v299
      %v659 = vunpack.c.l.b16 %v300
      %v660 = vunpack.c.l.b16 %v301
      %v661 = vunpack.c.l.b16 %v302
      %v662 = vunpack.c.l.b16 %v303
      %v663 = vunpack.c.l.b16 %v304
      %v664 = vunpack.c.l.b16 %v305
      %v665 = vunpack.c.l.b16 %v306
      %v666 = vunpack.c.l.b16 %v307
      %v667 = vunpack.c.l.b16 %v308
      %v668 = vunpack.c.l.b16 %v309
      %v669 = vunpack.c.l.b16 %v310
      %v670 = vunpack.c.l.b16 %v311
      %v671 = vunpack.c.l.b16 %v312
      %v672 = vunpack.c.l.b16 %v313
      %v673 = vunpack.c.l.b16 %v314
      %v674 = vunpack.c.l.b16 %v315
      %v675 = vunpack.c.l.b16 %v316
      %v676 = vunpack.c.l.b16 %v317
      %v677 = vunpack.c.l.b16 %v318
      %v678 = vunpack.c.l.b16 %v319
      %v679 = vunpack.c.l.b16 %v320
      %v680 = vunpack.c.l.b16 %v321
      %v681 = vunpack.c.l.b16 %v322
      %v682 = vunpack.c.l.b16 %v323
      %v683 = vunpack.c.l.b16 %v324
      %v684 = vunpack.c.l.b16 %v325
      %v685 = vunpack.c.l.b16 %v326
      %v686 = vunpack.c.l.b16 %v327
      %v687 = vunpack.c.l.b16 %v328
      %v688 = vunpack.c.l.b16 %v329
      %v689 = vunpack.c.l.b16 %v330
      %v690 = vunpack.c.l.b16 %v331
      %v691 = vunpack.c.l.b16 %v332
      %v692 = vunpack.c.l.b16 %v333
      %v693 = vunpack.c.l.b16 %v334
      %v694 = vunpack.c.l.b16 %v335
      %v695 = vunpack.c.l.b16 %v336
      %v696 = vunpack.c.l.b16 %v337
      %v697 = vunpack.c.l.b16 %v338
      %v698 = vpack.c.b16 %v651, %v650
      %v699 = vpack.c.b16 %v653, %v652
      %v700 = vpack.c.b16 %v655, %v654
      %v701 = vpack.c.b16 %v657, %v656
      %v702 = vpack.c.b16 %v659, %v658
      %v703 = vpack.c.b16 %v661, %v660
      %v704 = vpack.c.b16 %v663, %v662
      %v705 = vpack.c.b16 %v665, %v664
      %v706 = vpack.c.b16 %v667, %v666
      %v707 = vpack.c.b16 %v669, %v668
      %v708 = vpack.c.b16 %v671, %v670
      %v709 = vpack.c.b16 %v673, %v672
      %v710 = vpack.c.b16 %v675, %v674
      %v711 = vpack.c.b16 %v677, %v676
      %v712 = vpack.c.b16 %v679, %v678
      %v713 = vpack.c.b16 %v681, %v680
      %v714 = vpack.c.b16 %v683, %v682
      %v715 = vpack.c.b16 %v685, %v684
      %v716 = vpack.c.b16 %v687, %v686
      %v717 = vpack.c.b16 %v689, %v688
      %v718 = vpack.c.b16 %v691, %v690
      %v719 = vpack.c.b16 %v693, %v692
      %v720 = vpack.c.b16 %v695, %v694
      %v721 = vpack.c.b16 %v697, %v696
      %746 = vmatprep.subr.bf16.mxu0 0
      %747 = vmatpush1.bf16.msra.mxu0 %v705
      %748 = vmatprep.subr.bf16.mxu0 0
      %749 = vmatpush1.bf16.msra.mxu0 %v704
      %750 = vmatprep.subr.bf16.mxu0 0
      %751 = vmatpush1.bf16.msra.mxu0 %v703
      %752 = vmatprep.subr.bf16.mxu0 0
      %753 = vmatpush1.bf16.msra.mxu0 %v702
      %754 = vmatprep.subr.bf16.mxu0 0
      %755 = vmatpush1.bf16.msra.mxu0 %v701
      %756 = vmatprep.subr.bf16.mxu0 0
      %757 = vmatpush1.bf16.msra.mxu0 %v700
      %758 = vmatprep.subr.bf16.mxu0 0
      %759 = vmatpush1.bf16.msra.mxu0 %v699
      %760 = vmatprep.subr.bf16.mxu0 0
      %761 = vmatpush1.bf16.msra.mxu0 %v698
      %762 = vmatprep.subr.bf16.mxu0 0
      %763 = vmatpush2.bf16.msra.mxu0 %v713
      %764 = vmatprep.subr.bf16.mxu0 0
      %765 = vmatpush2.bf16.msra.mxu0 %v712
      %766 = vmatprep.subr.bf16.mxu0 0
      %767 = vmatpush2.bf16.msra.mxu0 %v711
      %768 = vmatprep.subr.bf16.mxu0 0
      %769 = vmatpush2.bf16.msra.mxu0 %v710
      %770 = vmatprep.subr.bf16.mxu0 0
      %771 = vmatpush2.bf16.msra.mxu0 %v709
      %772 = vmatprep.subr.bf16.mxu0 0
      %773 = vmatpush2.bf16.msra.mxu0 %v708
      %774 = vmatprep.subr.bf16.mxu0 0
      %775 = vmatpush2.bf16.msra.mxu0 %v707
      %776 = vmatprep.subr.bf16.mxu0 0
      %777 = vmatpush2.bf16.msra.mxu0 %v706
      %778 = vmatprep.mubr.bf16.mxu0 %v507
      %779 = vmatmul.mubr.bf16.gmra.mxu0 %v506
      %v780 = vpop.f32.mrf.mxu0
      %v781 = vadd.f32 %v344, %v780
      %v782 = vpop.f32.mrf.mxu0
      %v783 = vpop.f32.mrf.mxu0
      %v784 = vadd.f32 %v344, %v783
      %v785 = vpop.f32.mrf.mxu0
      %786 = vmatprep.mubr.bf16.mxu0 %v510
      %787 = vmatmul.mubr.bf16.gmra.mxu0 %v509
      %v788 = vpop.f32.mrf.mxu0
      %v789 = vadd.f32 %v344, %v788
      %v790 = vpop.f32.mrf.mxu0
      %v791 = vpop.f32.mrf.mxu0
      %v792 = vadd.f32 %v344, %v791
      %v793 = vpop.f32.mrf.mxu0
      %794 = vmatprep.mubr.bf16.mxu0 %v513
      %795 = vmatmul.mubr.bf16.gmra.mxu0 %v512
      %v796 = vpop.f32.mrf.mxu0
      %v797 = vadd.f32 %v344, %v796
      %v798 = vpop.f32.mrf.mxu0
      %v799 = vpop.f32.mrf.mxu0
      %v800 = vadd.f32 %v344, %v799
      %v801 = vpop.f32.mrf.mxu0
      %802 = vmatprep.mubr.bf16.mxu0 %v516
      %803 = vmatmul.mubr.bf16.gmra.mxu0 %v515
      %v804 = vpop.f32.mrf.mxu0
      %v805 = vadd.f32 %v344, %v804
      %v806 = vpop.f32.mrf.mxu0
      %v807 = vpop.f32.mrf.mxu0
      %v808 = vadd.f32 %v344, %v807
      %v809 = vpop.f32.mrf.mxu0
      %810 = vmatprep.mubr.bf16.mxu0 %v519
      %811 = vmatmul.mubr.bf16.gmra.mxu0 %v518
      %v812 = vpop.f32.mrf.mxu0
      %v813 = vadd.f32 %v344, %v812
      %v814 = vpop.f32.mrf.mxu0
      %v815 = vpop.f32.mrf.mxu0
      %v816 = vadd.f32 %v344, %v815
      %v817 = vpop.f32.mrf.mxu0
      %818 = vmatprep.mubr.bf16.mxu0 %v522
      %819 = vmatmul.mubr.bf16.gmra.mxu0 %v521
      %v820 = vpop.f32.mrf.mxu0
      %v821 = vadd.f32 %v344, %v820
      %v822 = vpop.f32.mrf.mxu0
      %v823 = vpop.f32.mrf.mxu0
      %v824 = vadd.f32 %v344, %v823
      %v825 = vpop.f32.mrf.mxu0
      %826 = vmatprep.mubr.bf16.mxu0 %v525
      %827 = vmatmul.mubr.bf16.gmra.mxu0 %v524
      %v828 = vpop.f32.mrf.mxu0
      %v829 = vadd.f32 %v344, %v828
      %v830 = vpop.f32.mrf.mxu0
      %v831 = vpop.f32.mrf.mxu0
      %v832 = vadd.f32 %v344, %v831
      %v833 = vpop.f32.mrf.mxu0
      %834 = vmatprep.mubr.bf16.mxu0 %v528
      %835 = vmatmul.mubr.bf16.gmra.mxu0 %v527
      %v836 = vpop.f32.mrf.mxu0
      %v837 = vadd.f32 %v344, %v836
      %v838 = vpop.f32.mrf.mxu0
      %v839 = vpop.f32.mrf.mxu0
      %v840 = vadd.f32 %v344, %v839
      %v841 = vpop.f32.mrf.mxu0
      %842 = vmatprep.mubr.bf16.mxu0 %v531
      %843 = vmatmul.mubr.bf16.gmra.mxu0 %v530
      %v844 = vpop.f32.mrf.mxu0
      %v845 = vadd.f32 %v344, %v844
      %v846 = vpop.f32.mrf.mxu0
      %v847 = vpop.f32.mrf.mxu0
      %v848 = vadd.f32 %v344, %v847
      %v849 = vpop.f32.mrf.mxu0
      %850 = vmatprep.mubr.bf16.mxu0 %v534
      %851 = vmatmul.mubr.bf16.gmra.mxu0 %v533
      %v852 = vpop.f32.mrf.mxu0
      %v853 = vadd.f32 %v344, %v852
      %v854 = vpop.f32.mrf.mxu0
      %v855 = vpop.f32.mrf.mxu0
      %v856 = vadd.f32 %v344, %v855
      %v857 = vpop.f32.mrf.mxu0
      %858 = vmatprep.mubr.bf16.mxu0 %v537
      %859 = vmatmul.mubr.bf16.gmra.mxu0 %v536
      %v860 = vpop.f32.mrf.mxu0
      %v861 = vadd.f32 %v344, %v860
      %v862 = vpop.f32.mrf.mxu0
      %v863 = vpop.f32.mrf.mxu0
      %v864 = vadd.f32 %v344, %v863
      %v865 = vpop.f32.mrf.mxu0
      %866 = vmatprep.mubr.bf16.mxu0 %v540
      %867 = vmatmul.mubr.bf16.gmra.mxu0 %v539
      %v868 = vpop.f32.mrf.mxu0
      %v869 = vadd.f32 %v344, %v868
      %v870 = vpop.f32.mrf.mxu0
      %v871 = vpop.f32.mrf.mxu0
      %v872 = vadd.f32 %v344, %v871
      %v873 = vpop.f32.mrf.mxu0
      %874 = vmatprep.mubr.bf16.mxu0 %v543
      %875 = vmatmul.mubr.bf16.gmra.mxu0 %v542
      %v876 = vpop.f32.mrf.mxu0
      %v877 = vadd.f32 %v344, %v876
      %v878 = vpop.f32.mrf.mxu0
      %v879 = vpop.f32.mrf.mxu0
      %v880 = vadd.f32 %v344, %v879
      %v881 = vpop.f32.mrf.mxu0
      %882 = vmatprep.mubr.bf16.mxu0 %v546
      %883 = vmatmul.mubr.bf16.gmra.mxu0 %v545
      %v884 = vpop.f32.mrf.mxu0
      %v885 = vadd.f32 %v344, %v884
      %v886 = vpop.f32.mrf.mxu0
      %v887 = vpop.f32.mrf.mxu0
      %v888 = vadd.f32 %v344, %v887
      %v889 = vpop.f32.mrf.mxu0
      %890 = vmatprep.mubr.bf16.mxu0 %v549
      %891 = vmatmul.mubr.bf16.gmra.mxu0 %v548
      %v892 = vpop.f32.mrf.mxu0
      %v893 = vadd.f32 %v344, %v892
      %v894 = vpop.f32.mrf.mxu0
      %v895 = vpop.f32.mrf.mxu0
      %v896 = vadd.f32 %v344, %v895
      %v897 = vpop.f32.mrf.mxu0
      %898 = vmatprep.mubr.bf16.mxu0 %v552
      %899 = vmatmul.mubr.bf16.gmra.mxu0 %v551
      %v900 = vpop.f32.mrf.mxu0
      %v901 = vadd.f32 %v344, %v900
      %v902 = vpop.f32.mrf.mxu0
      %v903 = vpop.f32.mrf.mxu0
      %v904 = vadd.f32 %v344, %v903
      %v905 = vpop.f32.mrf.mxu0
      %906 = vdwg.mxu0
      %907 = vmatprep.subr.bf16.mxu0 0
      %908 = vmatpush1.bf16.msra.mxu0 %v721
      %909 = vmatprep.subr.bf16.mxu0 0
      %910 = vmatpush1.bf16.msra.mxu0 %v720
      %911 = vmatprep.subr.bf16.mxu0 0
      %912 = vmatpush1.bf16.msra.mxu0 %v719
      %913 = vmatprep.subr.bf16.mxu0 0
      %914 = vmatpush1.bf16.msra.mxu0 %v718
      %915 = vmatprep.subr.bf16.mxu0 0
      %916 = vmatpush1.bf16.msra.mxu0 %v717
      %917 = vmatprep.subr.bf16.mxu0 0
      %918 = vmatpush1.bf16.msra.mxu0 %v716
      %919 = vmatprep.subr.bf16.mxu0 0
      %920 = vmatpush1.bf16.msra.mxu0 %v715
      %921 = vmatprep.subr.bf16.mxu0 0
      %922 = vmatpush1.bf16.msra.mxu0 %v714
      %923 = vmatprep.subr.bf16.mxu0 0
      %924 = vmatpush2.bf16.msra.mxu0 0
      %925 = vmatprep.subr.bf16.mxu0 0
      %926 = vmatpush2.bf16.msra.mxu0 0
      %927 = vmatprep.subr.bf16.mxu0 0
      %928 = vmatpush2.bf16.msra.mxu0 0
      %929 = vmatprep.subr.bf16.mxu0 0
      %930 = vmatpush2.bf16.msra.mxu0 0
      %931 = vmatprep.subr.bf16.mxu0 0
      %932 = vmatpush2.bf16.msra.mxu0 0
      %933 = vmatprep.subr.bf16.mxu0 0
      %934 = vmatpush2.bf16.msra.mxu0 0
      %935 = vmatprep.subr.bf16.mxu0 0
      %936 = vmatpush2.bf16.msra.mxu0 0
      %937 = vmatprep.subr.bf16.mxu0 0
      %938 = vmatpush2.bf16.msra.mxu0 0
      %939 = vmatprep.mubr.bf16.mxu0 0
      %940 = vmatmul.mubr.bf16.gmra.mxu0 %v508
      %v941 = vpop.f32.mrf.mxu0
      %v942 = vadd.f32 %v781, %v941
      %v943 = vpop.f32.mrf.mxu0
      %v944 = vpop.f32.mrf.mxu0
      %v945 = vadd.f32 %v784, %v944
      %v946 = vpop.f32.mrf.mxu0
      %947 = vmatprep.mubr.bf16.mxu0 0
      %948 = vmatmul.mubr.bf16.gmra.mxu0 %v511
      %v949 = vpop.f32.mrf.mxu0
      %v950 = vadd.f32 %v789, %v949
      %v951 = vpop.f32.mrf.mxu0
      %v952 = vpop.f32.mrf.mxu0
      %v953 = vadd.f32 %v792, %v952
      %v954 = vpop.f32.mrf.mxu0
      %955 = vmatprep.mubr.bf16.mxu0 0
      %956 = vmatmul.mubr.bf16.gmra.mxu0 %v514
      %v957 = vpop.f32.mrf.mxu0
      %v958 = vadd.f32 %v797, %v957
      %v959 = vpop.f32.mrf.mxu0
      %v960 = vpop.f32.mrf.mxu0
      %v961 = vadd.f32 %v800, %v960
      %v962 = vpop.f32.mrf.mxu0
      %963 = vmatprep.mubr.bf16.mxu0 0
      %964 = vmatmul.mubr.bf16.gmra.mxu0 %v517
      %v965 = vpop.f32.mrf.mxu0
      %v966 = vadd.f32 %v805, %v965
      %v967 = vpop.f32.mrf.mxu0
      %v968 = vpop.f32.mrf.mxu0
      %v969 = vadd.f32 %v808, %v968
      %v970 = vpop.f32.mrf.mxu0
      %971 = vmatprep.mubr.bf16.mxu0 0
      %972 = vmatmul.mubr.bf16.gmra.mxu0 %v520
      %v973 = vpop.f32.mrf.mxu0
      %v974 = vadd.f32 %v813, %v973
      %v975 = vpop.f32.mrf.mxu0
      %v976 = vpop.f32.mrf.mxu0
      %v977 = vadd.f32 %v816, %v976
      %v978 = vpop.f32.mrf.mxu0
      %979 = vmatprep.mubr.bf16.mxu0 0
      %980 = vmatmul.mubr.bf16.gmra.mxu0 %v523
      %v981 = vpop.f32.mrf.mxu0
      %v982 = vadd.f32 %v821, %v981
      %v983 = vpop.f32.mrf.mxu0
      %v984 = vpop.f32.mrf.mxu0
      %v985 = vadd.f32 %v824, %v984
      %v986 = vpop.f32.mrf.mxu0
      %987 = vmatprep.mubr.bf16.mxu0 0
      %988 = vmatmul.mubr.bf16.gmra.mxu0 %v526
      %v989 = vpop.f32.mrf.mxu0
      %v990 = vadd.f32 %v829, %v989
      %v991 = vpop.f32.mrf.mxu0
      %v992 = vpop.f32.mrf.mxu0
      %v993 = vadd.f32 %v832, %v992
      %v994 = vpop.f32.mrf.mxu0
      %995 = vmatprep.mubr.bf16.mxu0 0
      %996 = vmatmul.mubr.bf16.gmra.mxu0 %v529
      %v997 = vpop.f32.mrf.mxu0
      %v998 = vadd.f32 %v837, %v997
      %v999 = vpop.f32.mrf.mxu0
      %v1000 = vpop.f32.mrf.mxu0
      %v1001 = vadd.f32 %v840, %v1000
      %v1002 = vpop.f32.mrf.mxu0
      %1003 = vmatprep.mubr.bf16.mxu0 0
      %1004 = vmatmul.mubr.bf16.gmra.mxu0 %v532
      %v1005 = vpop.f32.mrf.mxu0
      %v1006 = vadd.f32 %v845, %v1005
      %v1007 = vpop.f32.mrf.mxu0
      %v1008 = vpop.f32.mrf.mxu0
      %v1009 = vadd.f32 %v848, %v1008
      %v1010 = vpop.f32.mrf.mxu0
      %1011 = vmatprep.mubr.bf16.mxu0 0
      %1012 = vmatmul.mubr.bf16.gmra.mxu0 %v535
      %v1013 = vpop.f32.mrf.mxu0
      %v1014 = vadd.f32 %v853, %v1013
      %v1015 = vpop.f32.mrf.mxu0
      %v1016 = vpop.f32.mrf.mxu0
      %v1017 = vadd.f32 %v856, %v1016
      %v1018 = vpop.f32.mrf.mxu0
      %1019 = vmatprep.mubr.bf16.mxu0 0
      %1020 = vmatmul.mubr.bf16.gmra.mxu0 %v538
      %v1021 = vpop.f32.mrf.mxu0
      %v1022 = vadd.f32 %v861, %v1021
      %v1023 = vpop.f32.mrf.mxu0
      %v1024 = vpop.f32.mrf.mxu0
      %v1025 = vadd.f32 %v864, %v1024
      %v1026 = vpop.f32.mrf.mxu0
      %1027 = vmatprep.mubr.bf16.mxu0 0
      %1028 = vmatmul.mubr.bf16.gmra.mxu0 %v541
      %v1029 = vpop.f32.mrf.mxu0
      %v1030 = vadd.f32 %v869, %v1029
      %v1031 = vpop.f32.mrf.mxu0
      %v1032 = vpop.f32.mrf.mxu0
      %v1033 = vadd.f32 %v872, %v1032
      %v1034 = vpop.f32.mrf.mxu0
      %1035 = vmatprep.mubr.bf16.mxu0 0
      %1036 = vmatmul.mubr.bf16.gmra.mxu0 %v544
      %v1037 = vpop.f32.mrf.mxu0
      %v1038 = vadd.f32 %v877, %v1037
      %v1039 = vpop.f32.mrf.mxu0
      %v1040 = vpop.f32.mrf.mxu0
      %v1041 = vadd.f32 %v880, %v1040
      %v1042 = vpop.f32.mrf.mxu0
      %1043 = vmatprep.mubr.bf16.mxu0 0
      %1044 = vmatmul.mubr.bf16.gmra.mxu0 %v547
      %v1045 = vpop.f32.mrf.mxu0
      %v1046 = vadd.f32 %v885, %v1045
      %v1047 = vpop.f32.mrf.mxu0
      %v1048 = vpop.f32.mrf.mxu0
      %v1049 = vadd.f32 %v888, %v1048
      %v1050 = vpop.f32.mrf.mxu0
      %1051 = vmatprep.mubr.bf16.mxu0 0
      %1052 = vmatmul.mubr.bf16.gmra.mxu0 %v550
      %v1053 = vpop.f32.mrf.mxu0
      %v1054 = vadd.f32 %v893, %v1053
      %v1055 = vpop.f32.mrf.mxu0
      %v1056 = vpop.f32.mrf.mxu0
      %v1057 = vadd.f32 %v896, %v1056
      %v1058 = vpop.f32.mrf.mxu0
      %1059 = vmatprep.mubr.bf16.mxu0 0
      %1060 = vmatmul.mubr.bf16.gmra.mxu0 %v553
      %v1061 = vpop.f32.mrf.mxu0
      %v1062 = vadd.f32 %v901, %v1061
      %v1063 = vpop.f32.mrf.mxu0
      %v1064 = vpop.f32.mrf.mxu0
      %v1065 = vadd.f32 %v904, %v1064
      %v1066 = vpop.f32.mrf.mxu0
      %1067 = vdwg.mxu0
      %v1068 = vlaneseq
      %v1069 = vand.u32 %v1068, 127
      %vm1070 = vcmp.lt.s32.totalorder %v1069, 96
      %v1071 = vmul.f32 %v942, 0.5
      %v1072 = vmul.f32 %v945, 0.5
      %v1073 = vmul.f32 %v950, 0.5
      %v1074 = vmul.f32 %v953, 0.5
      %v1075 = vmul.f32 %v958, 0.5
      %v1076 = vmul.f32 %v961, 0.5
      %v1077 = vmul.f32 %v966, 0.5
      %v1078 = vmul.f32 %v969, 0.5
      %v1079 = vmul.f32 %v974, 0.5
      %v1080 = vmul.f32 %v977, 0.5
      %v1081 = vmul.f32 %v982, 0.5
      %v1082 = vmul.f32 %v985, 0.5
      %v1083 = vmul.f32 %v990, 0.5
      %v1084 = vmul.f32 %v993, 0.5
      %v1085 = vmul.f32 %v998, 0.5
      %v1086 = vmul.f32 %v1001, 0.5
      %v1087 = vmul.f32 %v1006, 0.5
      %v1088 = vmul.f32 %v1009, 0.5
      %v1089 = vmul.f32 %v1014, 0.5
      %v1090 = vmul.f32 %v1017, 0.5
      %v1091 = vmul.f32 %v1022, 0.5
      %v1092 = vmul.f32 %v1025, 0.5
      %v1093 = vmul.f32 %v1030, 0.5
      %v1094 = vmul.f32 %v1033, 0.5
      %v1095 = vmul.f32 %v1038, 0.5
      %v1096 = vmul.f32 %v1041, 0.5
      %v1097 = vmul.f32 %v1046, 0.5
      %v1098 = vmul.f32 %v1049, 0.5
      %v1099 = vmul.f32 %v1054, 0.5
      %v1100 = vmul.f32 %v1057, 0.5
      %v1101 = vmul.f32 %v1062, 0.5
      %v1102 = vmul.f32 %v1065, 0.5
      %v1103 = vsel %vm1070, %v1071, %v942
      %v1104 = vsel %vm1070, %v1072, %v945
      %v1105 = vsel %vm1070, %v1073, %v950
      %v1106 = vsel %vm1070, %v1074, %v953
      %v1107 = vsel %vm1070, %v1075, %v958
      %v1108 = vsel %vm1070, %v1076, %v961
      %v1109 = vsel %vm1070, %v1077, %v966
      %v1110 = vsel %vm1070, %v1078, %v969
      %v1111 = vsel %vm1070, %v1079, %v974
      %v1112 = vsel %vm1070, %v1080, %v977
      %v1113 = vsel %vm1070, %v1081, %v982
      %v1114 = vsel %vm1070, %v1082, %v985
      %v1115 = vsel %vm1070, %v1083, %v990
      %v1116 = vsel %vm1070, %v1084, %v993
      %v1117 = vsel %vm1070, %v1085, %v998
      %v1118 = vsel %vm1070, %v1086, %v1001
      %v1119 = vsel %vm1070, %v1087, %v1006
      %v1120 = vsel %vm1070, %v1088, %v1009
      %v1121 = vsel %vm1070, %v1089, %v1014
      %v1122 = vsel %vm1070, %v1090, %v1017
      %v1123 = vsel %vm1070, %v1091, %v1022
      %v1124 = vsel %vm1070, %v1092, %v1025
      %v1125 = vsel %vm1070, %v1093, %v1030
      %v1126 = vsel %vm1070, %v1094, %v1033
      %v1127 = vsel %vm1070, %v1095, %v1038
      %v1128 = vsel %vm1070, %v1096, %v1041
      %v1129 = vsel %vm1070, %v1097, %v1046
      %v1130 = vsel %vm1070, %v1098, %v1049
      %v1131 = vsel %vm1070, %v1099, %v1054
      %v1132 = vsel %vm1070, %v1100, %v1057
      %v1133 = vsel %vm1070, %v1101, %v1062
      %v1134 = vsel %vm1070, %v1102, %v1065
      %v1135 = vtanh.pop %v1103
      %v1136 = vtanh.pop %v1104
      %v1137 = vtanh.pop %v1105
      %v1138 = vtanh.pop %v1106
      %v1139 = vtanh.pop %v1107
      %v1140 = vtanh.pop %v1108
      %v1141 = vtanh.pop %v1109
      %v1142 = vtanh.pop %v1110
      %v1143 = vtanh.pop %v1111
      %v1144 = vtanh.pop %v1112
      %v1145 = vtanh.pop %v1113
      %v1146 = vtanh.pop %v1114
      %v1147 = vtanh.pop %v1115
      %v1148 = vtanh.pop %v1116
      %v1149 = vtanh.pop %v1117
      %v1150 = vtanh.pop %v1118
      %v1151 = vtanh.pop %v1119
      %v1152 = vtanh.pop %v1120
      %v1153 = vtanh.pop %v1121
      %v1154 = vtanh.pop %v1122
      %v1155 = vtanh.pop %v1123
      %v1156 = vtanh.pop %v1124
      %v1157 = vtanh.pop %v1125
      %v1158 = vtanh.pop %v1126
      %v1159 = vtanh.pop %v1127
      %v1160 = vtanh.pop %v1128
      %v1161 = vtanh.pop %v1129
      %v1162 = vtanh.pop %v1130
      %v1163 = vtanh.pop %v1131
      %v1164 = vtanh.pop %v1132
      %v1165 = vtanh.pop %v1133
      %v1166 = vtanh.pop %v1134
      %v1167 = vmul.f32 %v1135, 0.5
      %v1168 = vmul.f32 %v1136, 0.5
      %v1169 = vmul.f32 %v1137, 0.5
      %v1170 = vmul.f32 %v1138, 0.5
      %v1171 = vmul.f32 %v1139, 0.5
      %v1172 = vmul.f32 %v1140, 0.5
      %v1173 = vmul.f32 %v1141, 0.5
      %v1174 = vmul.f32 %v1142, 0.5
      %v1175 = vmul.f32 %v1143, 0.5
      %v1176 = vmul.f32 %v1144, 0.5
      %v1177 = vmul.f32 %v1145, 0.5
      %v1178 = vmul.f32 %v1146, 0.5
      %v1179 = vmul.f32 %v1147, 0.5
      %v1180 = vmul.f32 %v1148, 0.5
      %v1181 = vmul.f32 %v1149, 0.5
      %v1182 = vmul.f32 %v1150, 0.5
      %v1183 = vmul.f32 %v1151, 0.5
      %v1184 = vmul.f32 %v1152, 0.5
      %v1185 = vmul.f32 %v1153, 0.5
      %v1186 = vmul.f32 %v1154, 0.5
      %v1187 = vmul.f32 %v1155, 0.5
      %v1188 = vmul.f32 %v1156, 0.5
      %v1189 = vmul.f32 %v1157, 0.5
      %v1190 = vmul.f32 %v1158, 0.5
      %v1191 = vmul.f32 %v1159, 0.5
      %v1192 = vmul.f32 %v1160, 0.5
      %v1193 = vmul.f32 %v1161, 0.5
      %v1194 = vmul.f32 %v1162, 0.5
      %v1195 = vmul.f32 %v1163, 0.5
      %v1196 = vmul.f32 %v1164, 0.5
      %v1197 = vmul.f32 %v1165, 0.5
      %v1198 = vmul.f32 %v1166, 0.5
      %v1199 = vadd.f32 %v1167, 0.5
      %v1200 = vadd.f32 %v1168, 0.5
      %v1201 = vadd.f32 %v1169, 0.5
      %v1202 = vadd.f32 %v1170, 0.5
      %v1203 = vadd.f32 %v1171, 0.5
      %v1204 = vadd.f32 %v1172, 0.5
      %v1205 = vadd.f32 %v1173, 0.5
      %v1206 = vadd.f32 %v1174, 0.5
      %v1207 = vadd.f32 %v1175, 0.5
      %v1208 = vadd.f32 %v1176, 0.5
      %v1209 = vadd.f32 %v1177, 0.5
      %v1210 = vadd.f32 %v1178, 0.5
      %v1211 = vadd.f32 %v1179, 0.5
      %v1212 = vadd.f32 %v1180, 0.5
      %v1213 = vadd.f32 %v1181, 0.5
      %v1214 = vadd.f32 %v1182, 0.5
      %v1215 = vadd.f32 %v1183, 0.5
      %v1216 = vadd.f32 %v1184, 0.5
      %v1217 = vadd.f32 %v1185, 0.5
      %v1218 = vadd.f32 %v1186, 0.5
      %v1219 = vadd.f32 %v1187, 0.5
      %v1220 = vadd.f32 %v1188, 0.5
      %v1221 = vadd.f32 %v1189, 0.5
      %v1222 = vadd.f32 %v1190, 0.5
      %v1223 = vadd.f32 %v1191, 0.5
      %v1224 = vadd.f32 %v1192, 0.5
      %v1225 = vadd.f32 %v1193, 0.5
      %v1226 = vadd.f32 %v1194, 0.5
      %v1227 = vadd.f32 %v1195, 0.5
      %v1228 = vadd.f32 %v1196, 0.5
      %v1229 = vadd.f32 %v1197, 0.5
      %v1230 = vadd.f32 %v1198, 0.5
      %v1231 = vsel %vm1070, %v1199, %v1135
      %v1232 = vsel %vm1070, %v1200, %v1136
      %v1233 = vsel %vm1070, %v1201, %v1137
      %v1234 = vsel %vm1070, %v1202, %v1138
      %v1235 = vsel %vm1070, %v1203, %v1139
      %v1236 = vsel %vm1070, %v1204, %v1140
      %v1237 = vsel %vm1070, %v1205, %v1141
      %v1238 = vsel %vm1070, %v1206, %v1142
      %v1239 = vsel %vm1070, %v1207, %v1143
      %v1240 = vsel %vm1070, %v1208, %v1144
      %v1241 = vsel %vm1070, %v1209, %v1145
      %v1242 = vsel %vm1070, %v1210, %v1146
      %v1243 = vsel %vm1070, %v1211, %v1147
      %v1244 = vsel %vm1070, %v1212, %v1148
      %v1245 = vsel %vm1070, %v1213, %v1149
      %v1246 = vsel %vm1070, %v1214, %v1150
      %v1247 = vsel %vm1070, %v1215, %v1151
      %v1248 = vsel %vm1070, %v1216, %v1152
      %v1249 = vsel %vm1070, %v1217, %v1153
      %v1250 = vsel %vm1070, %v1218, %v1154
      %v1251 = vsel %vm1070, %v1219, %v1155
      %v1252 = vsel %vm1070, %v1220, %v1156
      %v1253 = vsel %vm1070, %v1221, %v1157
      %v1254 = vsel %vm1070, %v1222, %v1158
      %v1255 = vsel %vm1070, %v1223, %v1159
      %v1256 = vsel %vm1070, %v1224, %v1160
      %v1257 = vsel %vm1070, %v1225, %v1161
      %v1258 = vsel %vm1070, %v1226, %v1162
      %v1259 = vsel %vm1070, %v1227, %v1163
      %v1260 = vsel %vm1070, %v1228, %v1164
      %v1261 = vsel %vm1070, %v1229, %v1165
      %v1262 = vsel %vm1070, %v1230, %v1166
      %1263 = vrot.lane.b32.xlu0 %v1231, 64
      %v1264 = vpop.permute.xlu0 %1263
      %1265 = vrot.lane.b32.xlu0 %v1232, 64
      %v1266 = vpop.permute.xlu0 %1265
      %1267 = vrot.lane.b32.xlu0 %v1233, 64
      %v1268 = vpop.permute.xlu0 %1267
      %1269 = vrot.lane.b32.xlu0 %v1234, 64
      %v1270 = vpop.permute.xlu0 %1269
      %1271 = vrot.lane.b32.xlu0 %v1235, 64
      %v1272 = vpop.permute.xlu0 %1271
      %1273 = vrot.lane.b32.xlu0 %v1236, 64
      %v1274 = vpop.permute.xlu0 %1273
      %1275 = vrot.lane.b32.xlu0 %v1237, 64
      %v1276 = vpop.permute.xlu0 %1275
      %1277 = vrot.lane.b32.xlu0 %v1238, 64
      %v1278 = vpop.permute.xlu0 %1277
      %1279 = vrot.lane.b32.xlu0 %v1239, 64
      %v1280 = vpop.permute.xlu0 %1279
      %1281 = vrot.lane.b32.xlu0 %v1240, 64
      %v1282 = vpop.permute.xlu0 %1281
      %1283 = vrot.lane.b32.xlu0 %v1241, 64
      %v1284 = vpop.permute.xlu0 %1283
      %1285 = vrot.lane.b32.xlu0 %v1242, 64
      %v1286 = vpop.permute.xlu0 %1285
      %1287 = vrot.lane.b32.xlu0 %v1243, 64
      %v1288 = vpop.permute.xlu0 %1287
      %1289 = vrot.lane.b32.xlu0 %v1244, 64
      %v1290 = vpop.permute.xlu0 %1289
      %1291 = vrot.lane.b32.xlu0 %v1245, 64
      %v1292 = vpop.permute.xlu0 %1291
      %1293 = vrot.lane.b32.xlu0 %v1246, 64
      %v1294 = vpop.permute.xlu0 %1293
      %1295 = vrot.lane.b32.xlu0 %v1247, 64
      %v1296 = vpop.permute.xlu0 %1295
      %1297 = vrot.lane.b32.xlu0 %v1248, 64
      %v1298 = vpop.permute.xlu0 %1297
      %1299 = vrot.lane.b32.xlu0 %v1249, 64
      %v1300 = vpop.permute.xlu0 %1299
      %1301 = vrot.lane.b32.xlu0 %v1250, 64
      %v1302 = vpop.permute.xlu0 %1301
      %1303 = vrot.lane.b32.xlu0 %v1251, 64
      %v1304 = vpop.permute.xlu0 %1303
      %1305 = vrot.lane.b32.xlu0 %v1252, 64
      %v1306 = vpop.permute.xlu0 %1305
      %1307 = vrot.lane.b32.xlu0 %v1253, 64
      %v1308 = vpop.permute.xlu0 %1307
      %1309 = vrot.lane.b32.xlu0 %v1254, 64
      %v1310 = vpop.permute.xlu0 %1309
      %1311 = vrot.lane.b32.xlu0 %v1255, 64
      %v1312 = vpop.permute.xlu0 %1311
      %1313 = vrot.lane.b32.xlu0 %v1256, 64
      %v1314 = vpop.permute.xlu0 %1313
      %1315 = vrot.lane.b32.xlu0 %v1257, 64
      %v1316 = vpop.permute.xlu0 %1315
      %1317 = vrot.lane.b32.xlu0 %v1258, 64
      %v1318 = vpop.permute.xlu0 %1317
      %1319 = vrot.lane.b32.xlu0 %v1259, 64
      %v1320 = vpop.permute.xlu0 %1319
      %1321 = vrot.lane.b32.xlu0 %v1260, 64
      %v1322 = vpop.permute.xlu0 %1321
      %1323 = vrot.lane.b32.xlu0 %v1261, 64
      %v1324 = vpop.permute.xlu0 %1323
      %1325 = vrot.lane.b32.xlu0 %v1262, 64
      %v1326 = vpop.permute.xlu0 %1325
      %v1327 = vmul.f32 %v1231, %v1264
      %v1328 = vmul.f32 %v1232, %v1266
      %v1329 = vmul.f32 %v1233, %v1268
      %v1330 = vmul.f32 %v1234, %v1270
      %v1331 = vmul.f32 %v1235, %v1272
      %v1332 = vmul.f32 %v1236, %v1274
      %v1333 = vmul.f32 %v1237, %v1276
      %v1334 = vmul.f32 %v1238, %v1278
      %v1335 = vmul.f32 %v1239, %v1280
      %v1336 = vmul.f32 %v1240, %v1282
      %v1337 = vmul.f32 %v1241, %v1284
      %v1338 = vmul.f32 %v1242, %v1286
      %v1339 = vmul.f32 %v1243, %v1288
      %v1340 = vmul.f32 %v1244, %v1290
      %v1341 = vmul.f32 %v1245, %v1292
      %v1342 = vmul.f32 %v1246, %v1294
      %v1343 = vmul.f32 %v1247, %v1296
      %v1344 = vmul.f32 %v1248, %v1298
      %v1345 = vmul.f32 %v1249, %v1300
      %v1346 = vmul.f32 %v1250, %v1302
      %v1347 = vmul.f32 %v1251, %v1304
      %v1348 = vmul.f32 %v1252, %v1306
      %v1349 = vmul.f32 %v1253, %v1308
      %v1350 = vmul.f32 %v1254, %v1310
      %v1351 = vmul.f32 %v1255, %v1312
      %v1352 = vmul.f32 %v1256, %v1314
      %v1353 = vmul.f32 %v1257, %v1316
      %v1354 = vmul.f32 %v1258, %v1318
      %v1355 = vmul.f32 %v1259, %v1320
      %v1356 = vmul.f32 %v1260, %v1322
      %v1357 = vmul.f32 %v1261, %v1324
      %v1358 = vmul.f32 %v1262, %v1326
      %v1359 = vld [vmem:[%s218] sm:$0xff]
      %v1360 = vld [vmem:[%s218 + $0x8] sm:$0xff]
      %v1361 = vld [vmem:[%s218 + $0x10] sm:$0xff]
      %v1362 = vld [vmem:[%s218 + $0x18] sm:$0xff]
      %v1363 = vld [vmem:[%s218 + $0x20] sm:$0xff]
      %v1364 = vld [vmem:[%s218 + $0x28] sm:$0xff]
      %v1365 = vld [vmem:[%s218 + $0x30] sm:$0xff]
      %v1366 = vld [vmem:[%s218 + $0x38] sm:$0xff]
      %v1367 = vld [vmem:[%s218 + $0x40] sm:$0xff]
      %v1368 = vld [vmem:[%s218 + $0x48] sm:$0xff]
      %v1369 = vld [vmem:[%s218 + $0x50] sm:$0xff]
      %v1370 = vld [vmem:[%s218 + $0x58] sm:$0xff]
      %v1371 = vld [vmem:[%s218 + $0x60] sm:$0xff]
      %v1372 = vld [vmem:[%s218 + $0x68] sm:$0xff]
      %v1373 = vld [vmem:[%s218 + $0x70] sm:$0xff]
      %v1374 = vld [vmem:[%s218 + $0x78] sm:$0xff]
      %v1375 = vld [vmem:[%s218 + $0x80] sm:$0xff]
      %v1376 = vld [vmem:[%s218 + $0x88] sm:$0xff]
      %v1377 = vld [vmem:[%s218 + $0x90] sm:$0xff]
      %v1378 = vld [vmem:[%s218 + $0x98] sm:$0xff]
      %v1379 = vld [vmem:[%s218 + $0xa0] sm:$0xff]
      %v1380 = vld [vmem:[%s218 + $0xa8] sm:$0xff]
      %v1381 = vld [vmem:[%s218 + $0xb0] sm:$0xff]
      %v1382 = vld [vmem:[%s218 + $0xb8] sm:$0xff]
      %v1383 = vld [vmem:[%s218 + $0xc0] sm:$0xff]
      %v1384 = vld [vmem:[%s218 + $0xc8] sm:$0xff]
      %v1385 = vld [vmem:[%s218 + $0xd0] sm:$0xff]
      %v1386 = vld [vmem:[%s218 + $0xd8] sm:$0xff]
      %v1387 = vld [vmem:[%s218 + $0xe0] sm:$0xff]
      %v1388 = vld [vmem:[%s218 + $0xe8] sm:$0xff]
      %v1389 = vld [vmem:[%s218 + $0xf0] sm:$0xff]
      %v1390 = vld [vmem:[%s218 + $0xf8] sm:$0xff]
      %v1391 = vmul.f32 %v1231, %v1359
      %v1392 = vmul.f32 %v1232, %v1360
      %v1393 = vmul.f32 %v1233, %v1361
      %v1394 = vmul.f32 %v1234, %v1362
      %v1395 = vmul.f32 %v1235, %v1363
      %v1396 = vmul.f32 %v1236, %v1364
      %v1397 = vmul.f32 %v1237, %v1365
      %v1398 = vmul.f32 %v1238, %v1366
      %v1399 = vmul.f32 %v1239, %v1367
      %v1400 = vmul.f32 %v1240, %v1368
      %v1401 = vmul.f32 %v1241, %v1369
      %v1402 = vmul.f32 %v1242, %v1370
      %v1403 = vmul.f32 %v1243, %v1371
      %v1404 = vmul.f32 %v1244, %v1372
      %v1405 = vmul.f32 %v1245, %v1373
      %v1406 = vmul.f32 %v1246, %v1374
      %v1407 = vmul.f32 %v1247, %v1375
      %v1408 = vmul.f32 %v1248, %v1376
      %v1409 = vmul.f32 %v1249, %v1377
      %v1410 = vmul.f32 %v1250, %v1378
      %v1411 = vmul.f32 %v1251, %v1379
      %v1412 = vmul.f32 %v1252, %v1380
      %v1413 = vmul.f32 %v1253, %v1381
      %v1414 = vmul.f32 %v1254, %v1382
      %v1415 = vmul.f32 %v1255, %v1383
      %v1416 = vmul.f32 %v1256, %v1384
      %v1417 = vmul.f32 %v1257, %v1385
      %v1418 = vmul.f32 %v1258, %v1386
      %v1419 = vmul.f32 %v1259, %v1387
      %v1420 = vmul.f32 %v1260, %v1388
      %v1421 = vmul.f32 %v1261, %v1389
      %v1422 = vmul.f32 %v1262, %v1390
      %1423 = vrot.lane.b32.xlu0 %v1327, 32
      %v1424 = vpop.permute.xlu0 %1423
      %1425 = vrot.lane.b32.xlu0 %v1328, 32
      %v1426 = vpop.permute.xlu0 %1425
      %1427 = vrot.lane.b32.xlu0 %v1329, 32
      %v1428 = vpop.permute.xlu0 %1427
      %1429 = vrot.lane.b32.xlu0 %v1330, 32
      %v1430 = vpop.permute.xlu0 %1429
      %1431 = vrot.lane.b32.xlu0 %v1331, 32
      %v1432 = vpop.permute.xlu0 %1431
      %1433 = vrot.lane.b32.xlu0 %v1332, 32
      %v1434 = vpop.permute.xlu0 %1433
      %1435 = vrot.lane.b32.xlu0 %v1333, 32
      %v1436 = vpop.permute.xlu0 %1435
      %1437 = vrot.lane.b32.xlu0 %v1334, 32
      %v1438 = vpop.permute.xlu0 %1437
      %1439 = vrot.lane.b32.xlu0 %v1335, 32
      %v1440 = vpop.permute.xlu0 %1439
      %1441 = vrot.lane.b32.xlu0 %v1336, 32
      %v1442 = vpop.permute.xlu0 %1441
      %1443 = vrot.lane.b32.xlu0 %v1337, 32
      %v1444 = vpop.permute.xlu0 %1443
      %1445 = vrot.lane.b32.xlu0 %v1338, 32
      %v1446 = vpop.permute.xlu0 %1445
      %1447 = vrot.lane.b32.xlu0 %v1339, 32
      %v1448 = vpop.permute.xlu0 %1447
      %1449 = vrot.lane.b32.xlu0 %v1340, 32
      %v1450 = vpop.permute.xlu0 %1449
      %1451 = vrot.lane.b32.xlu0 %v1341, 32
      %v1452 = vpop.permute.xlu0 %1451
      %1453 = vrot.lane.b32.xlu0 %v1342, 32
      %v1454 = vpop.permute.xlu0 %1453
      %1455 = vrot.lane.b32.xlu0 %v1343, 32
      %v1456 = vpop.permute.xlu0 %1455
      %1457 = vrot.lane.b32.xlu0 %v1344, 32
      %v1458 = vpop.permute.xlu0 %1457
      %1459 = vrot.lane.b32.xlu0 %v1345, 32
      %v1460 = vpop.permute.xlu0 %1459
      %1461 = vrot.lane.b32.xlu0 %v1346, 32
      %v1462 = vpop.permute.xlu0 %1461
      %1463 = vrot.lane.b32.xlu0 %v1347, 32
      %v1464 = vpop.permute.xlu0 %1463
      %1465 = vrot.lane.b32.xlu0 %v1348, 32
      %v1466 = vpop.permute.xlu0 %1465
      %1467 = vrot.lane.b32.xlu0 %v1349, 32
      %v1468 = vpop.permute.xlu0 %1467
      %1469 = vrot.lane.b32.xlu0 %v1350, 32
      %v1470 = vpop.permute.xlu0 %1469
      %1471 = vrot.lane.b32.xlu0 %v1351, 32
      %v1472 = vpop.permute.xlu0 %1471
      %1473 = vrot.lane.b32.xlu0 %v1352, 32
      %v1474 = vpop.permute.xlu0 %1473
      %1475 = vrot.lane.b32.xlu0 %v1353, 32
      %v1476 = vpop.permute.xlu0 %1475
      %1477 = vrot.lane.b32.xlu0 %v1354, 32
      %v1478 = vpop.permute.xlu0 %1477
      %1479 = vrot.lane.b32.xlu0 %v1355, 32
      %v1480 = vpop.permute.xlu0 %1479
      %1481 = vrot.lane.b32.xlu0 %v1356, 32
      %v1482 = vpop.permute.xlu0 %1481
      %1483 = vrot.lane.b32.xlu0 %v1357, 32
      %v1484 = vpop.permute.xlu0 %1483
      %1485 = vrot.lane.b32.xlu0 %v1358, 32
      %v1486 = vpop.permute.xlu0 %1485
      %v1487 = vadd.f32 %v1391, %v1424
      %v1488 = vadd.f32 %v1392, %v1426
      %v1489 = vadd.f32 %v1393, %v1428
      %v1490 = vadd.f32 %v1394, %v1430
      %v1491 = vadd.f32 %v1395, %v1432
      %v1492 = vadd.f32 %v1396, %v1434
      %v1493 = vadd.f32 %v1397, %v1436
      %v1494 = vadd.f32 %v1398, %v1438
      %v1495 = vadd.f32 %v1399, %v1440
      %v1496 = vadd.f32 %v1400, %v1442
      %v1497 = vadd.f32 %v1401, %v1444
      %v1498 = vadd.f32 %v1402, %v1446
      %v1499 = vadd.f32 %v1403, %v1448
      %v1500 = vadd.f32 %v1404, %v1450
      %v1501 = vadd.f32 %v1405, %v1452
      %v1502 = vadd.f32 %v1406, %v1454
      %v1503 = vadd.f32 %v1407, %v1456
      %v1504 = vadd.f32 %v1408, %v1458
      %v1505 = vadd.f32 %v1409, %v1460
      %v1506 = vadd.f32 %v1410, %v1462
      %v1507 = vadd.f32 %v1411, %v1464
      %v1508 = vadd.f32 %v1412, %v1466
      %v1509 = vadd.f32 %v1413, %v1468
      %v1510 = vadd.f32 %v1414, %v1470
      %v1511 = vadd.f32 %v1415, %v1472
      %v1512 = vadd.f32 %v1416, %v1474
      %v1513 = vadd.f32 %v1417, %v1476
      %v1514 = vadd.f32 %v1418, %v1478
      %v1515 = vadd.f32 %v1419, %v1480
      %v1516 = vadd.f32 %v1420, %v1482
      %v1517 = vadd.f32 %v1421, %v1484
      %v1518 = vadd.f32 %v1422, %v1486
      %v1519 = vtanh.pop %v1487
      %v1520 = vtanh.pop %v1488
      %v1521 = vtanh.pop %v1489
      %v1522 = vtanh.pop %v1490
      %v1523 = vtanh.pop %v1491
      %v1524 = vtanh.pop %v1492
      %v1525 = vtanh.pop %v1493
      %v1526 = vtanh.pop %v1494
      %v1527 = vtanh.pop %v1495
      %v1528 = vtanh.pop %v1496
      %v1529 = vtanh.pop %v1497
      %v1530 = vtanh.pop %v1498
      %v1531 = vtanh.pop %v1499
      %v1532 = vtanh.pop %v1500
      %v1533 = vtanh.pop %v1501
      %v1534 = vtanh.pop %v1502
      %v1535 = vtanh.pop %v1503
      %v1536 = vtanh.pop %v1504
      %v1537 = vtanh.pop %v1505
      %v1538 = vtanh.pop %v1506
      %v1539 = vtanh.pop %v1507
      %v1540 = vtanh.pop %v1508
      %v1541 = vtanh.pop %v1509
      %v1542 = vtanh.pop %v1510
      %v1543 = vtanh.pop %v1511
      %v1544 = vtanh.pop %v1512
      %v1545 = vtanh.pop %v1513
      %v1546 = vtanh.pop %v1514
      %v1547 = vtanh.pop %v1515
      %v1548 = vtanh.pop %v1516
      %v1549 = vtanh.pop %v1517
      %v1550 = vtanh.pop %v1518
      %v1551 = vmul.f32 %v1264, %v1519
      %v1552 = vmul.f32 %v1266, %v1520
      %v1553 = vmul.f32 %v1268, %v1521
      %v1554 = vmul.f32 %v1270, %v1522
      %v1555 = vmul.f32 %v1272, %v1523
      %v1556 = vmul.f32 %v1274, %v1524
      %v1557 = vmul.f32 %v1276, %v1525
      %v1558 = vmul.f32 %v1278, %v1526
      %v1559 = vmul.f32 %v1280, %v1527
      %v1560 = vmul.f32 %v1282, %v1528
      %v1561 = vmul.f32 %v1284, %v1529
      %v1562 = vmul.f32 %v1286, %v1530
      %v1563 = vmul.f32 %v1288, %v1531
      %v1564 = vmul.f32 %v1290, %v1532
      %v1565 = vmul.f32 %v1292, %v1533
      %v1566 = vmul.f32 %v1294, %v1534
      %v1567 = vmul.f32 %v1296, %v1535
      %v1568 = vmul.f32 %v1298, %v1536
      %v1569 = vmul.f32 %v1300, %v1537
      %v1570 = vmul.f32 %v1302, %v1538
      %v1571 = vmul.f32 %v1304, %v1539
      %v1572 = vmul.f32 %v1306, %v1540
      %v1573 = vmul.f32 %v1308, %v1541
      %v1574 = vmul.f32 %v1310, %v1542
      %v1575 = vmul.f32 %v1312, %v1543
      %v1576 = vmul.f32 %v1314, %v1544
      %v1577 = vmul.f32 %v1316, %v1545
      %v1578 = vmul.f32 %v1318, %v1546
      %v1579 = vmul.f32 %v1320, %v1547
      %v1580 = vmul.f32 %v1322, %v1548
      %v1581 = vmul.f32 %v1324, %v1549
      %v1582 = vmul.f32 %v1326, %v1550
      %vm1583 = vcmp.lt.s32.totalorder %v1069, 32
      %1584 = vrot.lane.b32.xlu0 %v1487, 64
      %v1585 = vpop.permute.xlu0 %1584
      %1586 = vrot.lane.b32.xlu0 %v1488, 64
      %v1587 = vpop.permute.xlu0 %1586
      %1588 = vrot.lane.b32.xlu0 %v1489, 64
      %v1589 = vpop.permute.xlu0 %1588
      %1590 = vrot.lane.b32.xlu0 %v1490, 64
      %v1591 = vpop.permute.xlu0 %1590
      %1592 = vrot.lane.b32.xlu0 %v1491, 64
      %v1593 = vpop.permute.xlu0 %1592
      %1594 = vrot.lane.b32.xlu0 %v1492, 64
      %v1595 = vpop.permute.xlu0 %1594
      %1596 = vrot.lane.b32.xlu0 %v1493, 64
      %v1597 = vpop.permute.xlu0 %1596
      %1598 = vrot.lane.b32.xlu0 %v1494, 64
      %v1599 = vpop.permute.xlu0 %1598
      %1600 = vrot.lane.b32.xlu0 %v1495, 64
      %v1601 = vpop.permute.xlu0 %1600
      %1602 = vrot.lane.b32.xlu0 %v1496, 64
      %v1603 = vpop.permute.xlu0 %1602
      %1604 = vrot.lane.b32.xlu0 %v1497, 64
      %v1605 = vpop.permute.xlu0 %1604
      %1606 = vrot.lane.b32.xlu0 %v1498, 64
      %v1607 = vpop.permute.xlu0 %1606
      %1608 = vrot.lane.b32.xlu0 %v1499, 64
      %v1609 = vpop.permute.xlu0 %1608
      %1610 = vrot.lane.b32.xlu0 %v1500, 64
      %v1611 = vpop.permute.xlu0 %1610
      %1612 = vrot.lane.b32.xlu0 %v1501, 64
      %v1613 = vpop.permute.xlu0 %1612
      %1614 = vrot.lane.b32.xlu0 %v1502, 64
      %v1615 = vpop.permute.xlu0 %1614
      %1616 = vrot.lane.b32.xlu0 %v1503, 64
      %v1617 = vpop.permute.xlu0 %1616
      %1618 = vrot.lane.b32.xlu0 %v1504, 64
      %v1619 = vpop.permute.xlu0 %1618
      %1620 = vrot.lane.b32.xlu0 %v1505, 64
      %v1621 = vpop.permute.xlu0 %1620
      %1622 = vrot.lane.b32.xlu0 %v1506, 64
      %v1623 = vpop.permute.xlu0 %1622
      %1624 = vrot.lane.b32.xlu0 %v1507, 64
      %v1625 = vpop.permute.xlu0 %1624
      %1626 = vrot.lane.b32.xlu0 %v1508, 64
      %v1627 = vpop.permute.xlu0 %1626
      %1628 = vrot.lane.b32.xlu0 %v1509, 64
      %v1629 = vpop.permute.xlu0 %1628
      %1630 = vrot.lane.b32.xlu0 %v1510, 64
      %v1631 = vpop.permute.xlu0 %1630
      %1632 = vrot.lane.b32.xlu0 %v1511, 64
      %v1633 = vpop.permute.xlu0 %1632
      %1634 = vrot.lane.b32.xlu0 %v1512, 64
      %v1635 = vpop.permute.xlu0 %1634
      %1636 = vrot.lane.b32.xlu0 %v1513, 64
      %v1637 = vpop.permute.xlu0 %1636
      %1638 = vrot.lane.b32.xlu0 %v1514, 64
      %v1639 = vpop.permute.xlu0 %1638
      %1640 = vrot.lane.b32.xlu0 %v1515, 64
      %v1641 = vpop.permute.xlu0 %1640
      %1642 = vrot.lane.b32.xlu0 %v1516, 64
      %v1643 = vpop.permute.xlu0 %1642
      %1644 = vrot.lane.b32.xlu0 %v1517, 64
      %v1645 = vpop.permute.xlu0 %1644
      %1646 = vrot.lane.b32.xlu0 %v1518, 64
      %v1647 = vpop.permute.xlu0 %1646
      %v1648 = vsel %vm1583, %v1551, %v1585
      %v1649 = vsel %vm1583, %v1552, %v1587
      %v1650 = vsel %vm1583, %v1553, %v1589
      %v1651 = vsel %vm1583, %v1554, %v1591
      %v1652 = vsel %vm1583, %v1555, %v1593
      %v1653 = vsel %vm1583, %v1556, %v1595
      %v1654 = vsel %vm1583, %v1557, %v1597
      %v1655 = vsel %vm1583, %v1558, %v1599
      %v1656 = vsel %vm1583, %v1559, %v1601
      %v1657 = vsel %vm1583, %v1560, %v1603
      %v1658 = vsel %vm1583, %v1561, %v1605
      %v1659 = vsel %vm1583, %v1562, %v1607
      %v1660 = vsel %vm1583, %v1563, %v1609
      %v1661 = vsel %vm1583, %v1564, %v1611
      %v1662 = vsel %vm1583, %v1565, %v1613
      %v1663 = vsel %vm1583, %v1566, %v1615
      %v1664 = vsel %vm1583, %v1567, %v1617
      %v1665 = vsel %vm1583, %v1568, %v1619
      %v1666 = vsel %vm1583, %v1569, %v1621
      %v1667 = vsel %vm1583, %v1570, %v1623
      %v1668 = vsel %vm1583, %v1571, %v1625
      %v1669 = vsel %vm1583, %v1572, %v1627
      %v1670 = vsel %vm1583, %v1573, %v1629
      %v1671 = vsel %vm1583, %v1574, %v1631
      %v1672 = vsel %vm1583, %v1575, %v1633
      %v1673 = vsel %vm1583, %v1576, %v1635
      %v1674 = vsel %vm1583, %v1577, %v1637
      %v1675 = vsel %vm1583, %v1578, %v1639
      %v1676 = vsel %vm1583, %v1579, %v1641
      %v1677 = vsel %vm1583, %v1580, %v1643
      %v1678 = vsel %vm1583, %v1581, %v1645
      %v1679 = vsel %vm1583, %v1582, %v1647
      %1680 = vst [vmem:[%s224] sm:$0xff] %v1648
      %1681 = vst [vmem:[%s224 + $0x8] sm:$0xff] %v1649
      %1682 = vst [vmem:[%s224 + $0x10] sm:$0xff] %v1650
      %1683 = vst [vmem:[%s224 + $0x18] sm:$0xff] %v1651
      %1684 = vst [vmem:[%s224 + $0x20] sm:$0xff] %v1652
      %1685 = vst [vmem:[%s224 + $0x28] sm:$0xff] %v1653
      %1686 = vst [vmem:[%s224 + $0x30] sm:$0xff] %v1654
      %1687 = vst [vmem:[%s224 + $0x38] sm:$0xff] %v1655
      %1688 = vst [vmem:[%s224 + $0x40] sm:$0xff] %v1656
      %1689 = vst [vmem:[%s224 + $0x48] sm:$0xff] %v1657
      %1690 = vst [vmem:[%s224 + $0x50] sm:$0xff] %v1658
      %1691 = vst [vmem:[%s224 + $0x58] sm:$0xff] %v1659
      %1692 = vst [vmem:[%s224 + $0x60] sm:$0xff] %v1660
      %1693 = vst [vmem:[%s224 + $0x68] sm:$0xff] %v1661
      %1694 = vst [vmem:[%s224 + $0x70] sm:$0xff] %v1662
      %1695 = vst [vmem:[%s224 + $0x78] sm:$0xff] %v1663
      %1696 = vst [vmem:[%s224 + $0x80] sm:$0xff] %v1664
      %1697 = vst [vmem:[%s224 + $0x88] sm:$0xff] %v1665
      %1698 = vst [vmem:[%s224 + $0x90] sm:$0xff] %v1666
      %1699 = vst [vmem:[%s224 + $0x98] sm:$0xff] %v1667
      %1700 = vst [vmem:[%s224 + $0xa0] sm:$0xff] %v1668
      %1701 = vst [vmem:[%s224 + $0xa8] sm:$0xff] %v1669
      %1702 = vst [vmem:[%s224 + $0xb0] sm:$0xff] %v1670
      %1703 = vst [vmem:[%s224 + $0xb8] sm:$0xff] %v1671
      %1704 = vst [vmem:[%s224 + $0xc0] sm:$0xff] %v1672
      %1705 = vst [vmem:[%s224 + $0xc8] sm:$0xff] %v1673
      %1706 = vst [vmem:[%s224 + $0xd0] sm:$0xff] %v1674
      %1707 = vst [vmem:[%s224 + $0xd8] sm:$0xff] %v1675
      %1708 = vst [vmem:[%s224 + $0xe0] sm:$0xff] %v1676
      %1709 = vst [vmem:[%s224 + $0xe8] sm:$0xff] %v1677
      %1710 = vst [vmem:[%s224 + $0xf0] sm:$0xff] %v1678
      %1711 = vst [vmem:[%s224 + $0xf8] sm:$0xff] %v1679
      %s1712 = smul.u32 32, %s15
      %p1713 = scmp.lt.s32.totalorder %s1712, 63
      %s1714 = scalar_select %p1713, %s1712, 63
      %s1715 = smul.addr %s1714, 8
      %s1716 = scalar_lea.vmem %s4, %s1715
      // Predicated region
      $region37: #{conv_lstm_cell.1} parent=35 // pred_check
        %p1717 = pneg %p127
      $region38: #{conv_lstm_cell.1} parent=35 // pred_check_branch
        %1719 = sbr.rel (%p1717) target = $region40
      $region39: #{conv_lstm_cell.1} parent=35 // pred_region
        %s1720 = smul.u32 32, %s15
      $region40: #{conv_lstm_cell.1} parent=35 // pred_fallthru
        _
    $region36: #{conv_lstm_cell.1} parent=5 // pred_fallthru
      _
    %p1721 = scmp.le.s32.totalorder 2, %s10
    // Predicated region
    $region41: #{conv_lstm_cell.1} parent=5 // pred_check
      %p1722 = pneg %p1721
    $region42: #{conv_lstm_cell.1} parent=5 // pred_check_branch
      %1724 = sbr.rel (%p1722) target = $region44
    $region43: #{conv_lstm_cell.1} parent=5 // pred_region
      %s1725 = ssub.s32 %s10, 2
      // Predicated region
      $region45: #{conv_lstm_cell.1} parent=43 // pred_check
        %p1726 = pneg %p133
      $region46: #{conv_lstm_cell.1} parent=43 // pred_check_branch
        %1728 = sbr.rel (%p1726) target = $region48
      $region47: #{conv_lstm_cell.1} parent=43 // pred_region
        %s1729 = smul.u32 32, %s16
        %p1730 = scmp.lt.s32.totalorder %s1729, 63
        %s1731 = scalar_select %p1730, %s1729, 63
        %s1732 = smul.addr %s1731, 8
        %s1733 = scalar_lea.vmem %s4, %s1732
      $region48: #{conv_lstm_cell.1} parent=43 // pred_fallthru
        _
    $region44: #{conv_lstm_cell.1} parent=5 // pred_fallthru
      _
  $region6: #{conv_lstm_cell.1} parent=0 // loop_footer
    %s14 = sadd.s32 1, %s10
  $region7: #{conv_lstm_cell.1} parent=0 // loop_footer_branch
    %9 = sbr.rel target = $region3
  $region8: #{conv_lstm_cell.1} parent=0 // loop_exit
    _

</llo_original>
